<compile_context>
chip_gen: v7x
topology: tpu7x:2x2x1
jax: 0.10.0
libtpu: 0.0.40
codegen_flags: <defaults>
</compile_context>

<pallas_src>
import functools
import math

import jax
import jax.numpy as jnp
from jax.experimental import pallas as pl
from jax.experimental.pallas import tpu as pltpu


def _round_up(x, m):
    return ((x + m - 1) // m) * m


# ----------------------------- Pallas kernel -------------------------------
def graphcon_gcn_kernel(
    x_ref,        # [Np, Fp]   bf16  input node features (padded)
    w_enc_ref,    # [Fp, Hp]   bf16  enc.weight^T
    b_enc_ref,    # [1, Hp]    f32
    w_conv_ref,   # [Hp, Hp]   bf16  conv.lin.weight^T
    b_conv_ref,   # [1, Hp]    f32   GCNConv bias
    w_res_ref,    # [Hp, Hp]   bf16  res.weight^T
    b_res_ref,    # [1, Hp]    f32
    w_dec_ref,    # [Hp, Cp]   bf16  dec.weight^T
    b_dec_ref,    # [1, Cp]    f32
    a_hbm_ref,    # [Np, Np]   bf16  dense normalized adjacency, stays in HBM
    out_ref,      # [Np, Cp]   f32
    ax_ref,       # scratch VMEM [Np, Hp] f32 : A_hat @ XW per layer
    abuf_ref,     # scratch VMEM [2, band, Np] bf16 : double-buffered A band
    sem_ref,      # scratch DMA semaphores (2,)
    *,
    nlayers: int,
    dt: float,
    alpha: float,
    gamma: float,
    band: int,
):
    n_rows, hp = ax_ref.shape
    n_bands = n_rows // band

    # Fold the recurrence constants at trace time (fewer VALU ops per layer).
    c1 = 1.0 - dt * alpha
    c2 = dt * gamma

    def start_band(b_idx, slot):
        pltpu.make_async_copy(
            a_hbm_ref.at[pl.ds(b_idx * band, band), :],
            abuf_ref.at[slot],
            sem_ref.at[slot],
        ).start()

    def wait_band(slot):
        # Same shape as the started copy; wait is keyed on the semaphore.
        pltpu.make_async_copy(
            a_hbm_ref.at[pl.ds(0, band), :],
            abuf_ref.at[slot],
            sem_ref.at[slot],
        ).wait()

    # Prefetch the first A row-band; overlaps with the encoder / XW matmuls.
    start_band(0, 0)

    # Hoisted loop invariants (JAX does not CSE broadcast_in_dim).
    # conv_out + res == A@XW - XW@W_res + (b_conv - b_res)
    bias_cr = jnp.broadcast_to(b_conv_ref[...] - b_res_ref[...], (n_rows, hp))
    w_conv = w_conv_ref[...]
    w_res = w_res_ref[...]

    # Encoder: Y = relu(x @ W_enc + b_enc); bf16 operands, f32 accumulation.
    Y = jnp.maximum(
        jnp.dot(x_ref[...], w_enc_ref[...], preferred_element_type=jnp.float32)
        + b_enc_ref[...],
        0.0,
    )
    X = Y

    def a_matmul(xw_bf16, start_first):
        """ax_ref <- A_hat @ xw, streaming A from HBM in double-buffered bands."""
        if start_first:
            start_band(0, 0)

        @pl.loop(0, n_bands)
        def _(i):
            slot = i & 1
            wait_band(slot)

            @pl.when(i + 1 < n_bands)
            def _():
                start_band(i + 1, 1 - slot)

            r0 = pl.multiple_of(i * band, band)
            ax_ref[pl.ds(r0, band), :] = jnp.dot(
                abuf_ref[slot], xw_bf16, preferred_element_type=jnp.float32
            )

    # GraphCON recurrence (dropout = identity in eval mode).
    # TODO(synk): for large nlayers switch to lax.fori_loop carrying (X, Y).
    for layer in range(nlayers):
        xw_bf16 = jnp.dot(
            X.astype(jnp.bfloat16), w_conv, preferred_element_type=jnp.float32
        ).astype(jnp.bfloat16)

        a_matmul(xw_bf16, start_first=(layer > 0))

        M = jnp.maximum(
            ax_ref[...]
            - jnp.dot(xw_bf16, w_res, preferred_element_type=jnp.float32)
            + bias_cr,
            0.0,
        )
        Y = c1 * Y + dt * M - c2 * X
        X = X + dt * Y

    # Decoder (lane-dense padded output => unmasked stores).
    out_ref[...] = (
        jnp.dot(X.astype(jnp.bfloat16), w_dec_ref[...],
                preferred_element_type=jnp.float32)
        + b_dec_ref[...]
    )


# ------------------------------- wrapper ------------------------------------
def build_norm_adj(edge_index, num_nodes):
    """Dense D^-1/2 (A + I) D^-1/2, matching PyG GCNConv gcn_norm semantics."""
    src, dst = edge_index[0], edge_index[1]
    loop = jnp.arange(num_nodes, dtype=edge_index.dtype)
    src = jnp.concatenate([src, loop])
    dst = jnp.concatenate([dst, loop])
    A = jnp.zeros((num_nodes, num_nodes), jnp.float32).at[dst, src].add(1.0)
    deg = A.sum(axis=1)
    dinv = jnp.where(deg > 0.0, 1.0 / jnp.sqrt(deg), 0.0)
    return dinv[:, None] * A * dinv[None, :]


def _pad2(a, rows, cols, dtype):
    out = jnp.zeros((rows, cols), dtype)
    return out.at[: a.shape[0], : a.shape[1]].set(a.astype(dtype))


def graphcon_gcn_forward(x, edge_index, params, *, nlayers, dt, alpha, gamma,
                         band=None):
    N, F = x.shape
    H = params["w_conv"].shape[0]
    C = params["w_dec"].shape[1]

    # Row-band size for streaming A: 256 suits v6e/v7x MXU (2x256x256),
    # 128 suits v5e (4x128x128) and small graphs.
    if band is None:
        band = 256 if N >= 256 else 128

    Np = _round_up(N, band)
    Fp = _round_up(F, 128)
    Hp = _round_up(H, 128)
    Cp = _round_up(C, 128)

    # Dense normalized adjacency, zero-padded; bf16 halves its HBM traffic.
    a_hat = build_norm_adj(edge_index, N)
    a_pad = jnp.zeros((Np, Np), jnp.bfloat16).at[:N, :N].set(
        a_hat.astype(jnp.bfloat16))

    x_p    = _pad2(x, Np, Fp, jnp.bfloat16)
    w_enc  = _pad2(params["w_enc"], Fp, Hp, jnp.bfloat16)
    b_enc  = _pad2(params["b_enc"], 1, Hp, jnp.float32)
    w_conv = _pad2(params["w_conv"], Hp, Hp, jnp.bfloat16)
    b_conv = _pad2(params["b_conv"], 1, Hp, jnp.float32)
    w_res  = _pad2(params["w_res"], Hp, Hp, jnp.bfloat16)
    b_res  = _pad2(params["b_res"], 1, Hp, jnp.float32)
    w_dec  = _pad2(params["w_dec"], Hp, Cp, jnp.bfloat16)
    b_dec  = _pad2(params["b_dec"], 1, Cp, jnp.float32)

    kernel = functools.partial(
        graphcon_gcn_kernel,
        nlayers=nlayers, dt=float(dt), alpha=float(alpha), gamma=float(gamma),
        band=band,
    )

    vmem_spec = pl.BlockSpec(memory_space=pltpu.MemorySpace.VMEM)
    any_spec = pl.BlockSpec(memory_space=pl.ANY)   # A_hat stays in HBM

    # Size the scoped VMEM limit from the actual resident footprint (+50%).
    a_buf_bytes = 2 * band * Np * 2                      # double-buffered band
    ax_bytes = Np * Hp * 4
    weight_bytes = (Fp * Hp + 2 * Hp * Hp + Hp * Cp) * 2 + (3 * Hp + Cp) * 4
    io_bytes = Np * Fp * 2 + Np * Cp * 4
    live_f32 = 6 * Np * Hp * 4                           # X, Y, M, XW, bias, tmp
    vmem_limit = int(min(
        max((a_buf_bytes + ax_bytes + weight_bytes + io_bytes + live_f32) * 1.5,
            32 << 20),
        64 << 20))

    out_p = pl.pallas_call(
        kernel,
        out_shape=jax.ShapeDtypeStruct((Np, Cp), jnp.float32),
        in_specs=[vmem_spec] * 9 + [any_spec],
        out_specs=vmem_spec,
        scratch_shapes=[
            pltpu.VMEM((Np, Hp), jnp.float32),            # ax_ref
            pltpu.VMEM((2, band, Np), jnp.bfloat16),      # abuf_ref
            pltpu.SemaphoreType.DMA((2,)),                # sem_ref
        ],
        compiler_params=pltpu.CompilerParams(vmem_limit_bytes=vmem_limit),
    )(x_p, w_enc, b_enc, w_conv, b_conv, w_res, b_res, w_dec, b_dec, a_pad)

    return out_p[:N, :C]


# ------------------------ pure-JAX f32 reference -----------------------------
def graphcon_gcn_reference(x, edge_index, params, *, nlayers, dt, alpha, gamma):
    a = build_norm_adj(edge_index, x.shape[0])
    Y = jax.nn.relu(x @ params["w_enc"] + params["b_enc"])
    X = Y
    for _ in range(nlayers):
        XW = X @ params["w_conv"]
        conv_out = a @ XW + params["b_conv"]
        res = -(XW @ params["w_res"] + params["b_res"])
        M = jax.nn.relu(conv_out + res)
        Y = Y + dt * (M - alpha * Y - gamma * X)
        X = X + dt * Y
    return X @ params["w_dec"] + params["b_dec"]


# --------------------------- parameter init ----------------------------------
def init_params(key, nfeat, nhid, nclass):
    """uniform(-stdv, stdv), stdv = 1/sqrt(nhid), mirroring reset_params()."""
    stdv = 1.0 / math.sqrt(nhid)
    keys = jax.random.split(key, 8)

    def u(k, shape):
        return jax.random.uniform(k, shape, jnp.float32, -stdv, stdv)

    return {
        # stored already transposed: y = x @ W^T  ->  x @ w
        "w_enc": u(keys[0], (nfeat, nhid)),
        "b_enc": u(keys[1], (1, nhid)),
        "w_conv": u(keys[2], (nhid, nhid)),   # conv.lin.weight^T (no bias in lin)
        "b_conv": u(keys[3], (1, nhid)),      # GCNConv bias
        "w_res": u(keys[4], (nhid, nhid)),
        "b_res": u(keys[5], (1, nhid)),
        "w_dec": u(keys[6], (nhid, nclass)),
        "b_dec": u(keys[7], (1, nclass)),
    }


# --------------------------------- main --------------------------------------
if __name__ == "__main__":
    N = 16        # number of graph nodes
    NFEAT = 8
    NHID = 32
    NCLASS = 4
    NLAYERS = 3
    E = 40        # number of directed edges
    DT, ALPHA, GAMMA = 1.0, 1.0, 1.0

    key = jax.random.PRNGKey(0)
    k_x, k_src, k_dst, k_p = jax.random.split(key, 4)

    x = jax.random.normal(k_x, (N, NFEAT), jnp.float32)
    edge_index = jnp.stack(
        [
            jax.random.randint(k_src, (E,), 0, N, dtype=jnp.int32),
            jax.random.randint(k_dst, (E,), 0, N, dtype=jnp.int32),
        ],
        axis=0,
    )
    params = init_params(k_p, NFEAT, NHID, NCLASS)

    out = graphcon_gcn_forward(
        x, edge_index, params, nlayers=NLAYERS, dt=DT, alpha=ALPHA, gamma=GAMMA
    )
    jax.block_until_ready(out)
    assert out.shape == (N, NCLASS)

    # Sanity check vs pure-JAX f32 reference (loose tol: bf16 MXU operands).
    ref = graphcon_gcn_reference(
        x, edge_index, params, nlayers=NLAYERS, dt=DT, alpha=ALPHA, gamma=GAMMA
    )
    err = float(jnp.max(jnp.abs(out - ref)))
    assert err < 1e-1, f"max abs error vs reference: {err}"

    print("KERNEL_OK")
</pallas_src>

<mosaic_0001>
module attributes {stable_mosaic.version = 11 : i64} {
  func.func @graphcon_gcn_kernel(%arg0: memref<128x128xbf16, #tpu.memory_space<vmem>>, %arg1: memref<128x128xbf16, #tpu.memory_space<vmem>>, %arg2: memref<1x128xf32, #tpu.memory_space<vmem>>, %arg3: memref<128x128xbf16, #tpu.memory_space<vmem>>, %arg4: memref<1x128xf32, #tpu.memory_space<vmem>>, %arg5: memref<128x128xbf16, #tpu.memory_space<vmem>>, %arg6: memref<1x128xf32, #tpu.memory_space<vmem>>, %arg7: memref<128x128xbf16, #tpu.memory_space<vmem>>, %arg8: memref<1x128xf32, #tpu.memory_space<vmem>>, %arg9: memref<128x128xbf16, #tpu.memory_space<any>>, %arg10: memref<128x128xf32, #tpu.memory_space<vmem>>, %arg11: memref<128x128xf32, #tpu.memory_space<vmem>>, %arg12: memref<2x128x128xbf16, #tpu.memory_space<vmem>>, %arg13: memref<2x!tpu.dma_semaphore, #tpu.memory_space<semaphore_mem>>) attributes {dimension_semantics = [], scalar_prefetch = 0 : i64, scratch_operands = 3 : i64, tpu.core_type = #tpu.core_type<tc>} {
    %c0_i32 = arith.constant 0 : i32
    %c0_i32_0 = arith.constant 0 : i32
    %c0_i32_1 = arith.constant 0 : i32
    %c0_i32_2 = arith.constant 0 : i32
    %0 = tpu.memref_slice %arg9[%c0_i32_1, %c0_i32_2] : memref<128x128xbf16, #tpu.memory_space<any>> -> memref<128x128xbf16, #tpu.memory_space<any>>
    %c0_i32_3 = arith.constant 0 : i32
    %c0_i32_4 = arith.constant 0 : i32
    %1 = tpu.memref_slice %arg12[%c0_i32, %c0_i32_3, %c0_i32_4] : memref<2x128x128xbf16, #tpu.memory_space<vmem>> -> memref<1x128x128xbf16, #tpu.memory_space<vmem>>
    %2 = tpu.memref_squeeze %1 : memref<1x128x128xbf16, #tpu.memory_space<vmem>> -> memref<128x128xbf16, #tpu.memory_space<vmem>>
    %3 = tpu.memref_slice %arg13[%c0_i32_0] : memref<2x!tpu.dma_semaphore, #tpu.memory_space<semaphore_mem>> -> memref<1x!tpu.dma_semaphore, #tpu.memory_space<semaphore_mem>>
    %4 = tpu.memref_squeeze %3 : memref<1x!tpu.dma_semaphore, #tpu.memory_space<semaphore_mem>> -> memref<!tpu.dma_semaphore, #tpu.memory_space<semaphore_mem>>
    tpu.enqueue_dma source(%0 : memref<128x128xbf16, #tpu.memory_space<any>>) target(%2 : memref<128x128xbf16, #tpu.memory_space<vmem>>) target_semaphore(%4 : memref<!tpu.dma_semaphore, #tpu.memory_space<semaphore_mem>>)
    %c0 = arith.constant 0 : index
    %c0_5 = arith.constant 0 : index
    %5 = vector.load %arg4[%c0, %c0_5] : memref<1x128xf32, #tpu.memory_space<vmem>>, vector<1x128xf32>
    %c0_6 = arith.constant 0 : index
    %c0_7 = arith.constant 0 : index
    %6 = vector.load %arg6[%c0_6, %c0_7] : memref<1x128xf32, #tpu.memory_space<vmem>>, vector<1x128xf32>
    %7 = arith.subf %5, %6 : vector<1x128xf32>
    %8 = vector.shape_cast %7 : vector<1x128xf32> to vector<1x128xf32>
    %9 = vector.broadcast %8 : vector<1x128xf32> to vector<128x128xf32>
    %c0_8 = arith.constant 0 : index
    %c0_9 = arith.constant 0 : index
    %10 = vector.load %arg3[%c0_8, %c0_9] : memref<128x128xbf16, #tpu.memory_space<vmem>>, vector<128x128xbf16>
    %c0_10 = arith.constant 0 : index
    %c0_11 = arith.constant 0 : index
    %11 = vector.load %arg5[%c0_10, %c0_11] : memref<128x128xbf16, #tpu.memory_space<vmem>>, vector<128x128xbf16>
    %c0_12 = arith.constant 0 : index
    %c0_13 = arith.constant 0 : index
    %12 = vector.load %arg0[%c0_12, %c0_13] : memref<128x128xbf16, #tpu.memory_space<vmem>>, vector<128x128xbf16>
    %c0_14 = arith.constant 0 : index
    %c0_15 = arith.constant 0 : index
    %13 = vector.load %arg1[%c0_14, %c0_15] : memref<128x128xbf16, #tpu.memory_space<vmem>>, vector<128x128xbf16>
    %cst = arith.constant dense<0.000000e+00> : vector<128x128xf32>
    %14 = tpu.matmul %12, %13, %cst {dimension_numbers = #tpu.dot_dimension_numbers<[1], [0], [0], [1], [0, 0, 1, 1], [], []>} : vector<128x128xbf16>, vector<128x128xbf16>, vector<128x128xf32> -> vector<128x128xf32>
    %c0_16 = arith.constant 0 : index
    %c0_17 = arith.constant 0 : index
    %15 = vector.load %arg2[%c0_16, %c0_17] : memref<1x128xf32, #tpu.memory_space<vmem>>, vector<1x128xf32>
    %16 = vector.broadcast %15 : vector<1x128xf32> to vector<128x128xf32>
    %17 = arith.addf %14, %16 : vector<128x128xf32>
    %cst_18 = arith.constant 0.000000e+00 : f32
    %18 = vector.broadcast %cst_18 : f32 to vector<128x128xf32>
    %19 = arith.maximumf %17, %18 : vector<128x128xf32>
    %20 = arith.truncf %19 : vector<128x128xf32> to vector<128x128xbf16>
    %cst_19 = arith.constant dense<0.000000e+00> : vector<128x128xf32>
    %21 = tpu.matmul %20, %10, %cst_19 {dimension_numbers = #tpu.dot_dimension_numbers<[1], [0], [0], [1], [0, 0, 1, 1], [], []>} : vector<128x128xbf16>, vector<128x128xbf16>, vector<128x128xf32> -> vector<128x128xf32>
    %22 = arith.truncf %21 : vector<128x128xf32> to vector<128x128xbf16>
    %c0_i32_20 = arith.constant 0 : i32
    %c1_i32 = arith.constant 1 : i32
    %23 = arith.muli %c0_i32_20, %c1_i32 : i32
    %c0_i32_21 = arith.constant 0 : i32
    %24 = arith.addi %c0_i32_21, %23 : i32
    %c1_i32_22 = arith.constant 1 : i32
    %25 = arith.andi %24, %c1_i32_22 : i32
    %c0_i32_23 = arith.constant 0 : i32
    %c0_i32_24 = arith.constant 0 : i32
    %26 = tpu.memref_slice %arg9[%c0_i32_23, %c0_i32_24] : memref<128x128xbf16, #tpu.memory_space<any>> -> memref<128x128xbf16, #tpu.memory_space<any>>
    %c0_i32_25 = arith.constant 0 : i32
    %c0_i32_26 = arith.constant 0 : i32
    %27 = tpu.memref_slice %arg12[%25, %c0_i32_25, %c0_i32_26] : memref<2x128x128xbf16, #tpu.memory_space<vmem>> -> memref<1x128x128xbf16, #tpu.memory_space<vmem>>
    %28 = tpu.memref_squeeze %27 : memref<1x128x128xbf16, #tpu.memory_space<vmem>> -> memref<128x128xbf16, #tpu.memory_space<vmem>>
    %29 = tpu.memref_slice %arg13[%25] : memref<2x!tpu.dma_semaphore, #tpu.memory_space<semaphore_mem>> -> memref<1x!tpu.dma_semaphore, #tpu.memory_space<semaphore_mem>>
    %30 = tpu.memref_squeeze %29 : memref<1x!tpu.dma_semaphore, #tpu.memory_space<semaphore_mem>> -> memref<!tpu.dma_semaphore, #tpu.memory_space<semaphore_mem>>
    tpu.wait_dma2 semaphore(%30 : memref<!tpu.dma_semaphore, #tpu.memory_space<semaphore_mem>>) src(%26 : memref<128x128xbf16, #tpu.memory_space<any>>) dst(%28 : memref<128x128xbf16, #tpu.memory_space<vmem>>)
    %c1_i32_27 = arith.constant 1 : i32
    %31 = arith.addi %24, %c1_i32_27 : i32
    %c1_i32_28 = arith.constant 1 : i32
    %32 = arith.cmpi slt, %31, %c1_i32_28 : i32
    %33 = arith.extui %32 : i1 to i32
    %c0_i32_29 = arith.constant 0 : i32
    %34 = arith.cmpi ne, %33, %c0_i32_29 : i32
    scf.if %34 {
      %c1_i32_114 = arith.constant 1 : i32
      %157 = arith.addi %24, %c1_i32_114 : i32
      %c1_i32_115 = arith.constant 1 : i32
      %158 = arith.subi %c1_i32_115, %25 : i32
      %c128_i32_116 = arith.constant 128 : i32
      %159 = arith.muli %157, %c128_i32_116 : i32
      %c0_i32_117 = arith.constant 0 : i32
      %160 = tpu.memref_slice %arg9[%159, %c0_i32_117] : memref<128x128xbf16, #tpu.memory_space<any>> -> memref<128x128xbf16, #tpu.memory_space<any>>
      %c0_i32_118 = arith.constant 0 : i32
      %c0_i32_119 = arith.constant 0 : i32
      %161 = tpu.memref_slice %arg12[%158, %c0_i32_118, %c0_i32_119] : memref<2x128x128xbf16, #tpu.memory_space<vmem>> -> memref<1x128x128xbf16, #tpu.memory_space<vmem>>
      %162 = tpu.memref_squeeze %161 : memref<1x128x128xbf16, #tpu.memory_space<vmem>> -> memref<128x128xbf16, #tpu.memory_space<vmem>>
      %163 = tpu.memref_slice %arg13[%158] : memref<2x!tpu.dma_semaphore, #tpu.memory_space<semaphore_mem>> -> memref<1x!tpu.dma_semaphore, #tpu.memory_space<semaphore_mem>>
      %164 = tpu.memref_squeeze %163 : memref<1x!tpu.dma_semaphore, #tpu.memory_space<semaphore_mem>> -> memref<!tpu.dma_semaphore, #tpu.memory_space<semaphore_mem>>
      tpu.enqueue_dma source(%160 : memref<128x128xbf16, #tpu.memory_space<any>>) target(%162 : memref<128x128xbf16, #tpu.memory_space<vmem>>) target_semaphore(%164 : memref<!tpu.dma_semaphore, #tpu.memory_space<semaphore_mem>>)
    } else {
    }
    %c128_i32 = arith.constant 128 : i32
    %35 = arith.muli %24, %c128_i32 : i32
    %36 = tpu.assume_multiple %35, 128 : i32
    %37 = arith.index_cast %25 : i32 to index
    %c0_30 = arith.constant 0 : index
    %c0_31 = arith.constant 0 : index
    %38 = vector.load %arg12[%37, %c0_30, %c0_31] : memref<2x128x128xbf16, #tpu.memory_space<vmem>>, vector<1x128x128xbf16>
    %39 = vector.shape_cast %38 : vector<1x128x128xbf16> to vector<128x128xbf16>
    %cst_32 = arith.constant dense<0.000000e+00> : vector<128x128xf32>
    %40 = tpu.matmul %39, %22, %cst_32 {dimension_numbers = #tpu.dot_dimension_numbers<[1], [0], [0], [1], [0, 0, 1, 1], [], []>} : vector<128x128xbf16>, vector<128x128xbf16>, vector<128x128xf32> -> vector<128x128xf32>
    %41 = arith.index_cast %36 : i32 to index
    %c0_33 = arith.constant 0 : index
    %42 = vector.load %arg11[%41, %c0_33] : memref<128x128xf32, #tpu.memory_space<vmem>>, vector<128x128xf32>
    tpu.vector_store %arg11[%41, %c0_33], %40 {strides = array<i32>} : memref<128x128xf32, #tpu.memory_space<vmem>>, vector<128x128xf32>,
    %c1_i32_34 = arith.constant 1 : i32
    %c0_35 = arith.constant 0 : index
    %c0_36 = arith.constant 0 : index
    %43 = vector.load %arg11[%c0_35, %c0_36] : memref<128x128xf32, #tpu.memory_space<vmem>>, vector<128x128xf32>
    %cst_37 = arith.constant dense<0.000000e+00> : vector<128x128xf32>
    %44 = tpu.matmul %22, %11, %cst_37 {dimension_numbers = #tpu.dot_dimension_numbers<[1], [0], [0], [1], [0, 0, 1, 1], [], []>} : vector<128x128xbf16>, vector<128x128xbf16>, vector<128x128xf32> -> vector<128x128xf32>
    %45 = arith.subf %43, %44 : vector<128x128xf32>
    %46 = arith.addf %45, %9 : vector<128x128xf32>
    %cst_38 = arith.constant 0.000000e+00 : f32
    %47 = vector.broadcast %cst_38 : f32 to vector<128x128xf32>
    %48 = arith.maximumf %46, %47 : vector<128x128xf32>
    %cst_39 = arith.constant 0.000000e+00 : f32
    %49 = vector.broadcast %cst_39 : f32 to vector<128x128xf32>
    %50 = arith.mulf %49, %19 : vector<128x128xf32>
    %cst_40 = arith.constant 1.000000e+00 : f32
    %51 = vector.broadcast %cst_40 : f32 to vector<128x128xf32>
    %52 = arith.mulf %51, %48 : vector<128x128xf32>
    %53 = arith.addf %50, %52 : vector<128x128xf32>
    %cst_41 = arith.constant 1.000000e+00 : f32
    %54 = vector.broadcast %cst_41 : f32 to vector<128x128xf32>
    %55 = arith.mulf %54, %19 : vector<128x128xf32>
    %56 = arith.subf %53, %55 : vector<128x128xf32>
    %cst_42 = arith.constant 1.000000e+00 : f32
    %57 = vector.broadcast %cst_42 : f32 to vector<128x128xf32>
    %58 = arith.mulf %57, %56 : vector<128x128xf32>
    %59 = arith.addf %19, %58 : vector<128x128xf32>
    %60 = arith.truncf %59 : vector<128x128xf32> to vector<128x128xbf16>
    %cst_43 = arith.constant dense<0.000000e+00> : vector<128x128xf32>
    %61 = tpu.matmul %60, %10, %cst_43 {dimension_numbers = #tpu.dot_dimension_numbers<[1], [0], [0], [1], [0, 0, 1, 1], [], []>} : vector<128x128xbf16>, vector<128x128xbf16>, vector<128x128xf32> -> vector<128x128xf32>
    %62 = arith.truncf %61 : vector<128x128xf32> to vector<128x128xbf16>
    %c0_i32_44 = arith.constant 0 : i32
    %c0_i32_45 = arith.constant 0 : i32
    %c0_i32_46 = arith.constant 0 : i32
    %c0_i32_47 = arith.constant 0 : i32
    %63 = tpu.memref_slice %arg9[%c0_i32_46, %c0_i32_47] : memref<128x128xbf16, #tpu.memory_space<any>> -> memref<128x128xbf16, #tpu.memory_space<any>>
    %c0_i32_48 = arith.constant 0 : i32
    %c0_i32_49 = arith.constant 0 : i32
    %64 = tpu.memref_slice %arg12[%c0_i32_44, %c0_i32_48, %c0_i32_49] : memref<2x128x128xbf16, #tpu.memory_space<vmem>> -> memref<1x128x128xbf16, #tpu.memory_space<vmem>>
    %65 = tpu.memref_squeeze %64 : memref<1x128x128xbf16, #tpu.memory_space<vmem>> -> memref<128x128xbf16, #tpu.memory_space<vmem>>
    %66 = tpu.memref_slice %arg13[%c0_i32_45] : memref<2x!tpu.dma_semaphore, #tpu.memory_space<semaphore_mem>> -> memref<1x!tpu.dma_semaphore, #tpu.memory_space<semaphore_mem>>
    %67 = tpu.memref_squeeze %66 : memref<1x!tpu.dma_semaphore, #tpu.memory_space<semaphore_mem>> -> memref<!tpu.dma_semaphore, #tpu.memory_space<semaphore_mem>>
    tpu.enqueue_dma source(%63 : memref<128x128xbf16, #tpu.memory_space<any>>) target(%65 : memref<128x128xbf16, #tpu.memory_space<vmem>>) target_semaphore(%67 : memref<!tpu.dma_semaphore, #tpu.memory_space<semaphore_mem>>)
    %c0_i32_50 = arith.constant 0 : i32
    %c1_i32_51 = arith.constant 1 : i32
    %68 = arith.muli %c0_i32_50, %c1_i32_51 : i32
    %c0_i32_52 = arith.constant 0 : i32
    %69 = arith.addi %c0_i32_52, %68 : i32
    %c1_i32_53 = arith.constant 1 : i32
    %70 = arith.andi %69, %c1_i32_53 : i32
    %c0_i32_54 = arith.constant 0 : i32
    %c0_i32_55 = arith.constant 0 : i32
    %71 = tpu.memref_slice %arg9[%c0_i32_54, %c0_i32_55] : memref<128x128xbf16, #tpu.memory_space<any>> -> memref<128x128xbf16, #tpu.memory_space<any>>
    %c0_i32_56 = arith.constant 0 : i32
    %c0_i32_57 = arith.constant 0 : i32
    %72 = tpu.memref_slice %arg12[%70, %c0_i32_56, %c0_i32_57] : memref<2x128x128xbf16, #tpu.memory_space<vmem>> -> memref<1x128x128xbf16, #tpu.memory_space<vmem>>
    %73 = tpu.memref_squeeze %72 : memref<1x128x128xbf16, #tpu.memory_space<vmem>> -> memref<128x128xbf16, #tpu.memory_space<vmem>>
    %74 = tpu.memref_slice %arg13[%70] : memref<2x!tpu.dma_semaphore, #tpu.memory_space<semaphore_mem>> -> memref<1x!tpu.dma_semaphore, #tpu.memory_space<semaphore_mem>>
    %75 = tpu.memref_squeeze %74 : memref<1x!tpu.dma_semaphore, #tpu.memory_space<semaphore_mem>> -> memref<!tpu.dma_semaphore, #tpu.memory_space<semaphore_mem>>
    tpu.wait_dma2 semaphore(%75 : memref<!tpu.dma_semaphore, #tpu.memory_space<semaphore_mem>>) src(%71 : memref<128x128xbf16, #tpu.memory_space<any>>) dst(%73 : memref<128x128xbf16, #tpu.memory_space<vmem>>)
    %c1_i32_58 = arith.constant 1 : i32
    %76 = arith.addi %69, %c1_i32_58 : i32
    %c1_i32_59 = arith.constant 1 : i32
    %77 = arith.cmpi slt, %76, %c1_i32_59 : i32
    %78 = arith.extui %77 : i1 to i32
    %c0_i32_60 = arith.constant 0 : i32
    %79 = arith.cmpi ne, %78, %c0_i32_60 : i32
    scf.if %79 {
      %c1_i32_114 = arith.constant 1 : i32
      %157 = arith.addi %69, %c1_i32_114 : i32
      %c1_i32_115 = arith.constant 1 : i32
      %158 = arith.subi %c1_i32_115, %70 : i32
      %c128_i32_116 = arith.constant 128 : i32
      %159 = arith.muli %157, %c128_i32_116 : i32
      %c0_i32_117 = arith.constant 0 : i32
      %160 = tpu.memref_slice %arg9[%159, %c0_i32_117] : memref<128x128xbf16, #tpu.memory_space<any>> -> memref<128x128xbf16, #tpu.memory_space<any>>
      %c0_i32_118 = arith.constant 0 : i32
      %c0_i32_119 = arith.constant 0 : i32
      %161 = tpu.memref_slice %arg12[%158, %c0_i32_118, %c0_i32_119] : memref<2x128x128xbf16, #tpu.memory_space<vmem>> -> memref<1x128x128xbf16, #tpu.memory_space<vmem>>
      %162 = tpu.memref_squeeze %161 : memref<1x128x128xbf16, #tpu.memory_space<vmem>> -> memref<128x128xbf16, #tpu.memory_space<vmem>>
      %163 = tpu.memref_slice %arg13[%158] : memref<2x!tpu.dma_semaphore, #tpu.memory_space<semaphore_mem>> -> memref<1x!tpu.dma_semaphore, #tpu.memory_space<semaphore_mem>>
      %164 = tpu.memref_squeeze %163 : memref<1x!tpu.dma_semaphore, #tpu.memory_space<semaphore_mem>> -> memref<!tpu.dma_semaphore, #tpu.memory_space<semaphore_mem>>
      tpu.enqueue_dma source(%160 : memref<128x128xbf16, #tpu.memory_space<any>>) target(%162 : memref<128x128xbf16, #tpu.memory_space<vmem>>) target_semaphore(%164 : memref<!tpu.dma_semaphore, #tpu.memory_space<semaphore_mem>>)
    } else {
    }
    %c128_i32_61 = arith.constant 128 : i32
    %80 = arith.muli %69, %c128_i32_61 : i32
    %81 = tpu.assume_multiple %80, 128 : i32
    %82 = arith.index_cast %70 : i32 to index
    %c0_62 = arith.constant 0 : index
    %c0_63 = arith.constant 0 : index
    %83 = vector.load %arg12[%82, %c0_62, %c0_63] : memref<2x128x128xbf16, #tpu.memory_space<vmem>>, vector<1x128x128xbf16>
    %84 = vector.shape_cast %83 : vector<1x128x128xbf16> to vector<128x128xbf16>
    %cst_64 = arith.constant dense<0.000000e+00> : vector<128x128xf32>
    %85 = tpu.matmul %84, %62, %cst_64 {dimension_numbers = #tpu.dot_dimension_numbers<[1], [0], [0], [1], [0, 0, 1, 1], [], []>} : vector<128x128xbf16>, vector<128x128xbf16>, vector<128x128xf32> -> vector<128x128xf32>
    %86 = arith.index_cast %81 : i32 to index
    %c0_65 = arith.constant 0 : index
    %87 = vector.load %arg11[%86, %c0_65] : memref<128x128xf32, #tpu.memory_space<vmem>>, vector<128x128xf32>
    tpu.vector_store %arg11[%86, %c0_65], %85 {strides = array<i32>} : memref<128x128xf32, #tpu.memory_space<vmem>>, vector<128x128xf32>,
    %c1_i32_66 = arith.constant 1 : i32
    %c0_67 = arith.constant 0 : index
    %c0_68 = arith.constant 0 : index
    %88 = vector.load %arg11[%c0_67, %c0_68] : memref<128x128xf32, #tpu.memory_space<vmem>>, vector<128x128xf32>
    %cst_69 = arith.constant dense<0.000000e+00> : vector<128x128xf32>
    %89 = tpu.matmul %62, %11, %cst_69 {dimension_numbers = #tpu.dot_dimension_numbers<[1], [0], [0], [1], [0, 0, 1, 1], [], []>} : vector<128x128xbf16>, vector<128x128xbf16>, vector<128x128xf32> -> vector<128x128xf32>
    %90 = arith.subf %88, %89 : vector<128x128xf32>
    %91 = arith.addf %90, %9 : vector<128x128xf32>
    %cst_70 = arith.constant 0.000000e+00 : f32
    %92 = vector.broadcast %cst_70 : f32 to vector<128x128xf32>
    %93 = arith.maximumf %91, %92 : vector<128x128xf32>
    %cst_71 = arith.constant 0.000000e+00 : f32
    %94 = vector.broadcast %cst_71 : f32 to vector<128x128xf32>
    %95 = arith.mulf %94, %56 : vector<128x128xf32>
    %cst_72 = arith.constant 1.000000e+00 : f32
    %96 = vector.broadcast %cst_72 : f32 to vector<128x128xf32>
    %97 = arith.mulf %96, %93 : vector<128x128xf32>
    %98 = arith.addf %95, %97 : vector<128x128xf32>
    %cst_73 = arith.constant 1.000000e+00 : f32
    %99 = vector.broadcast %cst_73 : f32 to vector<128x128xf32>
    %100 = arith.mulf %99, %59 : vector<128x128xf32>
    %101 = arith.subf %98, %100 : vector<128x128xf32>
    %cst_74 = arith.constant 1.000000e+00 : f32
    %102 = vector.broadcast %cst_74 : f32 to vector<128x128xf32>
    %103 = arith.mulf %102, %101 : vector<128x128xf32>
    %104 = arith.addf %59, %103 : vector<128x128xf32>
    %105 = arith.truncf %104 : vector<128x128xf32> to vector<128x128xbf16>
    %cst_75 = arith.constant dense<0.000000e+00> : vector<128x128xf32>
    %106 = tpu.matmul %105, %10, %cst_75 {dimension_numbers = #tpu.dot_dimension_numbers<[1], [0], [0], [1], [0, 0, 1, 1], [], []>} : vector<128x128xbf16>, vector<128x128xbf16>, vector<128x128xf32> -> vector<128x128xf32>
    %107 = arith.truncf %106 : vector<128x128xf32> to vector<128x128xbf16>
    %c0_i32_76 = arith.constant 0 : i32
    %c0_i32_77 = arith.constant 0 : i32
    %c0_i32_78 = arith.constant 0 : i32
    %c0_i32_79 = arith.constant 0 : i32
    %108 = tpu.memref_slice %arg9[%c0_i32_78, %c0_i32_79] : memref<128x128xbf16, #tpu.memory_space<any>> -> memref<128x128xbf16, #tpu.memory_space<any>>
    %c0_i32_80 = arith.constant 0 : i32
    %c0_i32_81 = arith.constant 0 : i32
    %109 = tpu.memref_slice %arg12[%c0_i32_76, %c0_i32_80, %c0_i32_81] : memref<2x128x128xbf16, #tpu.memory_space<vmem>> -> memref<1x128x128xbf16, #tpu.memory_space<vmem>>
    %110 = tpu.memref_squeeze %109 : memref<1x128x128xbf16, #tpu.memory_space<vmem>> -> memref<128x128xbf16, #tpu.memory_space<vmem>>
    %111 = tpu.memref_slice %arg13[%c0_i32_77] : memref<2x!tpu.dma_semaphore, #tpu.memory_space<semaphore_mem>> -> memref<1x!tpu.dma_semaphore, #tpu.memory_space<semaphore_mem>>
    %112 = tpu.memref_squeeze %111 : memref<1x!tpu.dma_semaphore, #tpu.memory_space<semaphore_mem>> -> memref<!tpu.dma_semaphore, #tpu.memory_space<semaphore_mem>>
    tpu.enqueue_dma source(%108 : memref<128x128xbf16, #tpu.memory_space<any>>) target(%110 : memref<128x128xbf16, #tpu.memory_space<vmem>>) target_semaphore(%112 : memref<!tpu.dma_semaphore, #tpu.memory_space<semaphore_mem>>)
    %c0_i32_82 = arith.constant 0 : i32
    %c1_i32_83 = arith.constant 1 : i32
    %113 = arith.muli %c0_i32_82, %c1_i32_83 : i32
    %c0_i32_84 = arith.constant 0 : i32
    %114 = arith.addi %c0_i32_84, %113 : i32
    %c1_i32_85 = arith.constant 1 : i32
    %115 = arith.andi %114, %c1_i32_85 : i32
    %c0_i32_86 = arith.constant 0 : i32
    %c0_i32_87 = arith.constant 0 : i32
    %116 = tpu.memref_slice %arg9[%c0_i32_86, %c0_i32_87] : memref<128x128xbf16, #tpu.memory_space<any>> -> memref<128x128xbf16, #tpu.memory_space<any>>
    %c0_i32_88 = arith.constant 0 : i32
    %c0_i32_89 = arith.constant 0 : i32
    %117 = tpu.memref_slice %arg12[%115, %c0_i32_88, %c0_i32_89] : memref<2x128x128xbf16, #tpu.memory_space<vmem>> -> memref<1x128x128xbf16, #tpu.memory_space<vmem>>
    %118 = tpu.memref_squeeze %117 : memref<1x128x128xbf16, #tpu.memory_space<vmem>> -> memref<128x128xbf16, #tpu.memory_space<vmem>>
    %119 = tpu.memref_slice %arg13[%115] : memref<2x!tpu.dma_semaphore, #tpu.memory_space<semaphore_mem>> -> memref<1x!tpu.dma_semaphore, #tpu.memory_space<semaphore_mem>>
    %120 = tpu.memref_squeeze %119 : memref<1x!tpu.dma_semaphore, #tpu.memory_space<semaphore_mem>> -> memref<!tpu.dma_semaphore, #tpu.memory_space<semaphore_mem>>
    tpu.wait_dma2 semaphore(%120 : memref<!tpu.dma_semaphore, #tpu.memory_space<semaphore_mem>>) src(%116 : memref<128x128xbf16, #tpu.memory_space<any>>) dst(%118 : memref<128x128xbf16, #tpu.memory_space<vmem>>)
    %c1_i32_90 = arith.constant 1 : i32
    %121 = arith.addi %114, %c1_i32_90 : i32
    %c1_i32_91 = arith.constant 1 : i32
    %122 = arith.cmpi slt, %121, %c1_i32_91 : i32
    %123 = arith.extui %122 : i1 to i32
    %c0_i32_92 = arith.constant 0 : i32
    %124 = arith.cmpi ne, %123, %c0_i32_92 : i32
    scf.if %124 {
      %c1_i32_114 = arith.constant 1 : i32
      %157 = arith.addi %114, %c1_i32_114 : i32
      %c1_i32_115 = arith.constant 1 : i32
      %158 = arith.subi %c1_i32_115, %115 : i32
      %c128_i32_116 = arith.constant 128 : i32
      %159 = arith.muli %157, %c128_i32_116 : i32
      %c0_i32_117 = arith.constant 0 : i32
      %160 = tpu.memref_slice %arg9[%159, %c0_i32_117] : memref<128x128xbf16, #tpu.memory_space<any>> -> memref<128x128xbf16, #tpu.memory_space<any>>
      %c0_i32_118 = arith.constant 0 : i32
      %c0_i32_119 = arith.constant 0 : i32
      %161 = tpu.memref_slice %arg12[%158, %c0_i32_118, %c0_i32_119] : memref<2x128x128xbf16, #tpu.memory_space<vmem>> -> memref<1x128x128xbf16, #tpu.memory_space<vmem>>
      %162 = tpu.memref_squeeze %161 : memref<1x128x128xbf16, #tpu.memory_space<vmem>> -> memref<128x128xbf16, #tpu.memory_space<vmem>>
      %163 = tpu.memref_slice %arg13[%158] : memref<2x!tpu.dma_semaphore, #tpu.memory_space<semaphore_mem>> -> memref<1x!tpu.dma_semaphore, #tpu.memory_space<semaphore_mem>>
      %164 = tpu.memref_squeeze %163 : memref<1x!tpu.dma_semaphore, #tpu.memory_space<semaphore_mem>> -> memref<!tpu.dma_semaphore, #tpu.memory_space<semaphore_mem>>
      tpu.enqueue_dma source(%160 : memref<128x128xbf16, #tpu.memory_space<any>>) target(%162 : memref<128x128xbf16, #tpu.memory_space<vmem>>) target_semaphore(%164 : memref<!tpu.dma_semaphore, #tpu.memory_space<semaphore_mem>>)
    } else {
    }
    %c128_i32_93 = arith.constant 128 : i32
    %125 = arith.muli %114, %c128_i32_93 : i32
    %126 = tpu.assume_multiple %125, 128 : i32
    %127 = arith.index_cast %115 : i32 to index
    %c0_94 = arith.constant 0 : index
    %c0_95 = arith.constant 0 : index
    %128 = vector.load %arg12[%127, %c0_94, %c0_95] : memref<2x128x128xbf16, #tpu.memory_space<vmem>>, vector<1x128x128xbf16>
    %129 = vector.shape_cast %128 : vector<1x128x128xbf16> to vector<128x128xbf16>
    %cst_96 = arith.constant dense<0.000000e+00> : vector<128x128xf32>
    %130 = tpu.matmul %129, %107, %cst_96 {dimension_numbers = #tpu.dot_dimension_numbers<[1], [0], [0], [1], [0, 0, 1, 1], [], []>} : vector<128x128xbf16>, vector<128x128xbf16>, vector<128x128xf32> -> vector<128x128xf32>
    %131 = arith.index_cast %126 : i32 to index
    %c0_97 = arith.constant 0 : index
    %132 = vector.load %arg11[%131, %c0_97] : memref<128x128xf32, #tpu.memory_space<vmem>>, vector<128x128xf32>
    tpu.vector_store %arg11[%131, %c0_97], %130 {strides = array<i32>} : memref<128x128xf32, #tpu.memory_space<vmem>>, vector<128x128xf32>,
    %c1_i32_98 = arith.constant 1 : i32
    %c0_99 = arith.constant 0 : index
    %c0_100 = arith.constant 0 : index
    %133 = vector.load %arg11[%c0_99, %c0_100] : memref<128x128xf32, #tpu.memory_space<vmem>>, vector<128x128xf32>
    %cst_101 = arith.constant dense<0.000000e+00> : vector<128x128xf32>
    %134 = tpu.matmul %107, %11, %cst_101 {dimension_numbers = #tpu.dot_dimension_numbers<[1], [0], [0], [1], [0, 0, 1, 1], [], []>} : vector<128x128xbf16>, vector<128x128xbf16>, vector<128x128xf32> -> vector<128x128xf32>
    %135 = arith.subf %133, %134 : vector<128x128xf32>
    %136 = arith.addf %135, %9 : vector<128x128xf32>
    %cst_102 = arith.constant 0.000000e+00 : f32
    %137 = vector.broadcast %cst_102 : f32 to vector<128x128xf32>
    %138 = arith.maximumf %136, %137 : vector<128x128xf32>
    %cst_103 = arith.constant 0.000000e+00 : f32
    %139 = vector.broadcast %cst_103 : f32 to vector<128x128xf32>
    %140 = arith.mulf %139, %101 : vector<128x128xf32>
    %cst_104 = arith.constant 1.000000e+00 : f32
    %141 = vector.broadcast %cst_104 : f32 to vector<128x128xf32>
    %142 = arith.mulf %141, %138 : vector<128x128xf32>
    %143 = arith.addf %140, %142 : vector<128x128xf32>
    %cst_105 = arith.constant 1.000000e+00 : f32
    %144 = vector.broadcast %cst_105 : f32 to vector<128x128xf32>
    %145 = arith.mulf %144, %104 : vector<128x128xf32>
    %146 = arith.subf %143, %145 : vector<128x128xf32>
    %cst_106 = arith.constant 1.000000e+00 : f32
    %147 = vector.broadcast %cst_106 : f32 to vector<128x128xf32>
    %148 = arith.mulf %147, %146 : vector<128x128xf32>
    %149 = arith.addf %104, %148 : vector<128x128xf32>
    %150 = arith.truncf %149 : vector<128x128xf32> to vector<128x128xbf16>
    %c0_107 = arith.constant 0 : index
    %c0_108 = arith.constant 0 : index
    %151 = vector.load %arg7[%c0_107, %c0_108] : memref<128x128xbf16, #tpu.memory_space<vmem>>, vector<128x128xbf16>
    %cst_109 = arith.constant dense<0.000000e+00> : vector<128x128xf32>
    %152 = tpu.matmul %150, %151, %cst_109 {dimension_numbers = #tpu.dot_dimension_numbers<[1], [0], [0], [1], [0, 0, 1, 1], [], []>} : vector<128x128xbf16>, vector<128x128xbf16>, vector<128x128xf32> -> vector<128x128xf32>
    %c0_110 = arith.constant 0 : index
    %c0_111 = arith.constant 0 : index
    %153 = vector.load %arg8[%c0_110, %c0_111] : memref<1x128xf32, #tpu.memory_space<vmem>>, vector<1x128xf32>
    %154 = vector.broadcast %153 : vector<1x128xf32> to vector<128x128xf32>
    %155 = arith.addf %152, %154 : vector<128x128xf32>
    %c0_112 = arith.constant 0 : index
    %c0_113 = arith.constant 0 : index
    %156 = vector.load %arg10[%c0_112, %c0_113] : memref<128x128xf32, #tpu.memory_space<vmem>>, vector<128x128xf32>
    tpu.vector_store %arg10[%c0_112, %c0_113], %155 {strides = array<i32>} : memref<128x128xf32, #tpu.memory_space<vmem>>, vector<128x128xf32>,
    return
  }
}

</mosaic_0001>

<llo_original>
// kernel: tpu_custom_call.1
$region0: #{tpu_custom_call.1}
  #allocation0 [shape = 'u32[]', space=smem, size = 0x4, offset = 0x4, fixed_abs, tag = 'smem constant byte address 0x4 - core index']
  #allocation1 [shape = 'u32[144,128]{1,0:T(1,128)}', space=vmem, size = 0x12000, scoped, tag = 'internal scratch']
  #allocation2 [shape = 'f32[128,128]{1,0:T(8,128)}', space=vmem, size = 0x10000, scoped, tag = 'scratch operand']
  #allocation3 [shape = 'bf16[2,128,128]{2,1,0:T(16,128)(2,1)}', space=vmem, size = 0x10000, scoped, tag = 'scratch operand']
  #allocation4 [shape = 's32[2]{0}', space=sflag, size = 0x8, scoped, tag = 'scratch operand']
  #allocation15 [shape = 's32[]', space=sflag, size = 0x4, offset = 0, fixed_abs, tag = 'sflag constant byte address 0x0 - dummy sync flag']
  #allocation16 [shape = 's32[]', space=sflag, size = 0x4, offset = 0, fixed_abs, tag = 'sflag constant byte address 0x0 - dummy sync flag']
  #allocation17 [shape = 'u32[]', space=smem, size = 0x4, offset = 0x44, fixed_abs, tag = 'smem constant byte address 0x44 - assertion arg 0']
  #allocation18 [shape = 'u32[]', space=smem, size = 0x4, offset = 0x48, fixed_abs, tag = 'smem constant byte address 0x48 - assertion arg 1']
  #allocation19 [shape = 's32[]', space=sflag, size = 0x4, offset = 0, fixed_abs, tag = 'sflag constant byte address 0x0 - dummy sync flag']
  #allocation20 [shape = 's32[]', space=sflag, size = 0x4, offset = 0, fixed_abs, tag = 'sflag constant byte address 0x0 - dummy sync flag']
  #allocation21 [shape = 's32[]', space=sflag, size = 0x4, offset = 0, fixed_abs, tag = 'sflag constant byte address 0x0 - dummy sync flag']
  #allocation22 [shape = 's32[]', space=sflag, size = 0x4, offset = 0, fixed_abs, tag = 'sflag constant byte address 0x0 - dummy sync flag']
  %s0 = inlined_call_operand.hbm [shape: bf16[128,128], index: 0, kind: input, shape index: {}]
  %s1 = inlined_call_operand.hbm [shape: bf16[128,128], index: 1, kind: input, shape index: {}]
  %s2 = inlined_call_operand.vmem [shape: f32[1,128], index: 2, kind: input, shape index: {}]
  %s3 = inlined_call_operand.hbm [shape: bf16[128,128], index: 3, kind: input, shape index: {}]
  %s4 = inlined_call_operand.vmem [shape: f32[1,128], index: 4, kind: input, shape index: {}]
  %s5 = inlined_call_operand.hbm [shape: bf16[128,128], index: 5, kind: input, shape index: {}]
  %s6 = inlined_call_operand.vmem [shape: f32[1,128], index: 6, kind: input, shape index: {}]
  %s7 = inlined_call_operand.hbm [shape: bf16[128,128], index: 7, kind: input, shape index: {}]
  %s8 = inlined_call_operand.vmem [shape: f32[1,128], index: 8, kind: input, shape index: {}]
  %s9 = inlined_call_operand.hbm [shape: bf16[128,128], index: 9, kind: input, shape index: {}]
  %s10 = inlined_call_operand.hbm [shape: f32[128,128], index: 10, kind: output, shape index: {}]
  %s11 = sld [smem:[#allocation0]]
  $region78: #{tpu_custom_call.1} parent=0
    _
  %s13 = ssub.s32 1, %s11
  %s14 = scalar_select 0, %s13, %s11
  $region1: #{tpu_custom_call.1} parent=0
    #allocation5 [shape = 'u8[32768]{0}', space=vmem, size = 0x8000, scoped, tag = 'input window, operand 0, single buffered']
    #allocation6 [shape = 's32[1]{0}', space=sflag, size = 0x4, scoped, tag = 'scoped memory for tpu_custom_call.1']
    #allocation7 [shape = 's32[1]{0}', space=sflag, size = 0x4, scoped, tag = 'scoped memory for tpu_custom_call.1']
    #allocation8 [shape = 'u8[32768]{0}', space=vmem, size = 0x8000, scoped, tag = 'input window, operand 1, single buffered']
    #allocation9 [shape = 's32[1]{0}', space=sflag, size = 0x4, scoped, tag = 'scoped memory for tpu_custom_call.1']
    #allocation10 [shape = 'u8[32768]{0}', space=vmem, size = 0x8000, scoped, tag = 'input window, operand 3, single buffered']
    #allocation11 [shape = 'u8[32768]{0}', space=vmem, size = 0x8000, scoped, tag = 'input window, operand 5, single buffered']
    #allocation12 [shape = 's32[1]{0}', space=sflag, size = 0x4, scoped, tag = 'scoped memory for tpu_custom_call.1']
    #allocation13 [shape = 'u8[32768]{0}', space=vmem, size = 0x8000, scoped, tag = 'input window, operand 7, single buffered']
    #allocation14 [shape = 'u8[65536]{0}', space=vmem, size = 0x10000, scoped, tag = 'output window, operand 0, single buffered']
    %15 = vsyncpa [#allocation6], 0
    %16 = vsyncpa [#allocation9], 0
    %17 = vsyncpa [#allocation12], 0
    %18 = vsyncpa [#allocation7], 0
    // Predicated region
    $region2: #{tpu_custom_call.1} parent=1 // pred_check
      _
    $region3: #{tpu_custom_call.1} parent=1 // pred_check_branch
      %20 = sbr.rel (0) target = $region5
    $region4: #{tpu_custom_call.1} parent=1 // pred_region
      %s22 = ssub.s32 1024, 1024
      %23 = vsyncadd [#allocation6], %s22
      %s24 = sshll.u32 [#allocation5], 4
      %s25 = int_to_ptr.vmem [resolvable:$true] %s24
      %30 = dma.hbm_to_vmem [thread:$0]  %s0, 1024, %s25, [#allocation6], 64, 64, 4
    $region5: #{tpu_custom_call.1} parent=1 // pred_fallthru
      _
    // Predicated region
    $region6: #{tpu_custom_call.1} parent=1 // pred_check
      _
    $region7: #{tpu_custom_call.1} parent=1 // pred_check_branch
      %32 = sbr.rel (0) target = $region9
    $region8: #{tpu_custom_call.1} parent=1 // pred_region
      %s34 = ssub.s32 1024, 1024
      %35 = vsyncadd [#allocation9], %s34
      %s36 = sshll.u32 [#allocation8], 4
      %s37 = int_to_ptr.vmem [resolvable:$true] %s36
      %42 = dma.hbm_to_vmem [thread:$0]  %s1, 1024, %s37, [#allocation9], 64, 64, 4
    $region9: #{tpu_custom_call.1} parent=1 // pred_fallthru
      _
    // Predicated region
    $region10: #{tpu_custom_call.1} parent=1 // pred_check
      _
    $region11: #{tpu_custom_call.1} parent=1 // pred_check_branch
      %44 = sbr.rel (0) target = $region13
    $region12: #{tpu_custom_call.1} parent=1 // pred_region
      _
    $region13: #{tpu_custom_call.1} parent=1 // pred_fallthru
      _
    // Predicated region
    $region14: #{tpu_custom_call.1} parent=1 // pred_check
      _
    $region15: #{tpu_custom_call.1} parent=1 // pred_check_branch
      %46 = sbr.rel (0) target = $region17
    $region16: #{tpu_custom_call.1} parent=1 // pred_region
      %s48 = ssub.s32 1024, 1024
      %49 = vsyncadd [#allocation9], %s48
      %s50 = sshll.u32 [#allocation10], 4
      %s51 = int_to_ptr.vmem [resolvable:$true] %s50
      %56 = dma.hbm_to_vmem [thread:$0]  %s3, 1024, %s51, [#allocation9], 64, 64, 4
    $region17: #{tpu_custom_call.1} parent=1 // pred_fallthru
      _
    // Predicated region
    $region18: #{tpu_custom_call.1} parent=1 // pred_check
      _
    $region19: #{tpu_custom_call.1} parent=1 // pred_check_branch
      %58 = sbr.rel (0) target = $region21
    $region20: #{tpu_custom_call.1} parent=1 // pred_region
      _
    $region21: #{tpu_custom_call.1} parent=1 // pred_fallthru
      _
    // Predicated region
    $region22: #{tpu_custom_call.1} parent=1 // pred_check
      _
    $region23: #{tpu_custom_call.1} parent=1 // pred_check_branch
      %60 = sbr.rel (0) target = $region25
    $region24: #{tpu_custom_call.1} parent=1 // pred_region
      %s62 = ssub.s32 1024, 1024
      %63 = vsyncadd [#allocation12], %s62
      %s64 = sshll.u32 [#allocation11], 4
      %s65 = int_to_ptr.vmem [resolvable:$true] %s64
      %70 = dma.hbm_to_vmem [thread:$0]  %s5, 1024, %s65, [#allocation12], 64, 64, 4
    $region25: #{tpu_custom_call.1} parent=1 // pred_fallthru
      _
    // Predicated region
    $region26: #{tpu_custom_call.1} parent=1 // pred_check
      _
    $region27: #{tpu_custom_call.1} parent=1 // pred_check_branch
      %72 = sbr.rel (0) target = $region29
    $region28: #{tpu_custom_call.1} parent=1 // pred_region
      _
    $region29: #{tpu_custom_call.1} parent=1 // pred_fallthru
      _
    // Predicated region
    $region30: #{tpu_custom_call.1} parent=1 // pred_check
      _
    $region31: #{tpu_custom_call.1} parent=1 // pred_check_branch
      %74 = sbr.rel (0) target = $region33
    $region32: #{tpu_custom_call.1} parent=1 // pred_region
      %s76 = ssub.s32 1024, 1024
      %77 = vsyncadd [#allocation12], %s76
      %s78 = sshll.u32 [#allocation13], 4
      %s79 = int_to_ptr.vmem [resolvable:$true] %s78
      %84 = dma.hbm_to_vmem [thread:$0]  %s7, 1024, %s79, [#allocation12], 64, 64, 4
    $region33: #{tpu_custom_call.1} parent=1 // pred_fallthru
      _
    // Predicated region
    $region34: #{tpu_custom_call.1} parent=1 // pred_check
      _
    $region35: #{tpu_custom_call.1} parent=1 // pred_check_branch
      %86 = sbr.rel (0) target = $region37
    $region36: #{tpu_custom_call.1} parent=1 // pred_region
      _
    $region37: #{tpu_custom_call.1} parent=1 // pred_fallthru
      _
    // Predicated region
    $region38: #{tpu_custom_call.1} parent=1 // pred_check
      _
    $region39: #{tpu_custom_call.1} parent=1 // pred_check_branch
      %88 = sbr.rel (0) target = $region41
    $region40: #{tpu_custom_call.1} parent=1 // pred_region
      %89 = dma.done [#allocation6], 1024
    $region41: #{tpu_custom_call.1} parent=1 // pred_fallthru
      _
    // Predicated region
    $region42: #{tpu_custom_call.1} parent=1 // pred_check
      _
    $region43: #{tpu_custom_call.1} parent=1 // pred_check_branch
      %91 = sbr.rel (0) target = $region45
    $region44: #{tpu_custom_call.1} parent=1 // pred_region
      %92 = dma.done [#allocation9], 1024
    $region45: #{tpu_custom_call.1} parent=1 // pred_fallthru
      _
    // Predicated region
    $region46: #{tpu_custom_call.1} parent=1 // pred_check
      _
    $region47: #{tpu_custom_call.1} parent=1 // pred_check_branch
      %94 = sbr.rel (0) target = $region49
    $region48: #{tpu_custom_call.1} parent=1 // pred_region
      %95 = dma.done [#allocation9], 1024
    $region49: #{tpu_custom_call.1} parent=1 // pred_fallthru
      _
    // Predicated region
    $region50: #{tpu_custom_call.1} parent=1 // pred_check
      _
    $region51: #{tpu_custom_call.1} parent=1 // pred_check_branch
      %97 = sbr.rel (0) target = $region53
    $region52: #{tpu_custom_call.1} parent=1 // pred_region
      %98 = dma.done [#allocation12], 1024
    $region53: #{tpu_custom_call.1} parent=1 // pred_fallthru
      _
    // Predicated region
    $region54: #{tpu_custom_call.1} parent=1 // pred_check
      _
    $region55: #{tpu_custom_call.1} parent=1 // pred_check_branch
      %100 = sbr.rel (0) target = $region57
    $region56: #{tpu_custom_call.1} parent=1 // pred_region
      %101 = dma.done [#allocation12], 1024
    $region57: #{tpu_custom_call.1} parent=1 // pred_fallthru
      _
    // Predicated region
    $region58: #{tpu_custom_call.1} parent=1 // pred_check
      _
    $region59: #{tpu_custom_call.1} parent=1 // pred_check_branch
      %104 = sbr.rel target = $region61
    $region60: #{tpu_custom_call.1} parent=1 // pred_region
      %105 = sst [smem:[#allocation17]] [#allocation16]
      %106 = sst [smem:[#allocation18]] [#allocation15]
    $region61: #{tpu_custom_call.1} parent=1 // pred_fallthru
      _
    %108 = shalt.err (0)
    %s110 = sshll.u32 [#allocation3], 4
    %s111 = int_to_ptr.vmem [resolvable:$true] %s110
    %113 = dma.hbm_to_vmem [thread:$0]  %s9, 1024, %s111, [#allocation4]
    %v114 = vld [vmem:[%s4] sm:$0x1]
    %v115 = vld [vmem:[%s6] sm:$0x1]
    %v116 = vsub.f32 %v114, %v115
    %v118 = vlaneseq
    %v119 = vshrl.u32 %v118, 7
    %v120 = vsub.s32 0, %v119
    %v121 = vrot.slane %v116, %v120
    %v123 = vld [vmem:[#allocation10] sm:$0xf]
    %v124 = vld [vmem:[#allocation10 + $0x4] sm:$0xf]
    %v125 = vld [vmem:[#allocation10 + $0x8] sm:$0xf]
    %v126 = vld [vmem:[#allocation10 + $0xc] sm:$0xf]
    %v127 = vld [vmem:[#allocation10 + $0x10] sm:$0xf]
    %v128 = vld [vmem:[#allocation10 + $0x14] sm:$0xf]
    %v129 = vld [vmem:[#allocation10 + $0x18] sm:$0xf]
    %v130 = vld [vmem:[#allocation10 + $0x1c] sm:$0xf]
    %v131 = vld [vmem:[#allocation10 + $0x20] sm:$0xf]
    %v132 = vld [vmem:[#allocation10 + $0x24] sm:$0xf]
    %v133 = vld [vmem:[#allocation10 + $0x28] sm:$0xf]
    %v134 = vld [vmem:[#allocation10 + $0x2c] sm:$0xf]
    %v135 = vld [vmem:[#allocation10 + $0x30] sm:$0xf]
    %v136 = vld [vmem:[#allocation10 + $0x34] sm:$0xf]
    %v137 = vld [vmem:[#allocation10 + $0x38] sm:$0xf]
    %v138 = vld [vmem:[#allocation10 + $0x3c] sm:$0xf]
    %v139 = vld [vmem:[#allocation11] sm:$0xf]
    %v140 = vld [vmem:[#allocation11 + $0x4] sm:$0xf]
    %v141 = vld [vmem:[#allocation11 + $0x8] sm:$0xf]
    %v142 = vld [vmem:[#allocation11 + $0xc] sm:$0xf]
    %v143 = vld [vmem:[#allocation11 + $0x10] sm:$0xf]
    %v144 = vld [vmem:[#allocation11 + $0x14] sm:$0xf]
    %v145 = vld [vmem:[#allocation11 + $0x18] sm:$0xf]
    %v146 = vld [vmem:[#allocation11 + $0x1c] sm:$0xf]
    %v147 = vld [vmem:[#allocation11 + $0x20] sm:$0xf]
    %v148 = vld [vmem:[#allocation11 + $0x24] sm:$0xf]
    %v149 = vld [vmem:[#allocation11 + $0x28] sm:$0xf]
    %v150 = vld [vmem:[#allocation11 + $0x2c] sm:$0xf]
    %v151 = vld [vmem:[#allocation11 + $0x30] sm:$0xf]
    %v152 = vld [vmem:[#allocation11 + $0x34] sm:$0xf]
    %v153 = vld [vmem:[#allocation11 + $0x38] sm:$0xf]
    %v154 = vld [vmem:[#allocation11 + $0x3c] sm:$0xf]
    %v155 = vld [vmem:[#allocation5] sm:$0xf]
    %v156 = vld [vmem:[#allocation5 + $0x4] sm:$0xf]
    %v157 = vld [vmem:[#allocation5 + $0x8] sm:$0xf]
    %v158 = vld [vmem:[#allocation5 + $0xc] sm:$0xf]
    %v159 = vld [vmem:[#allocation5 + $0x10] sm:$0xf]
    %v160 = vld [vmem:[#allocation5 + $0x14] sm:$0xf]
    %v161 = vld [vmem:[#allocation5 + $0x18] sm:$0xf]
    %v162 = vld [vmem:[#allocation5 + $0x1c] sm:$0xf]
    %v163 = vld [vmem:[#allocation5 + $0x20] sm:$0xf]
    %v164 = vld [vmem:[#allocation5 + $0x24] sm:$0xf]
    %v165 = vld [vmem:[#allocation5 + $0x28] sm:$0xf]
    %v166 = vld [vmem:[#allocation5 + $0x2c] sm:$0xf]
    %v167 = vld [vmem:[#allocation5 + $0x30] sm:$0xf]
    %v168 = vld [vmem:[#allocation5 + $0x34] sm:$0xf]
    %v169 = vld [vmem:[#allocation5 + $0x38] sm:$0xf]
    %v170 = vld [vmem:[#allocation5 + $0x3c] sm:$0xf]
    %v171 = vld [vmem:[#allocation8] sm:$0xf]
    %v172 = vld [vmem:[#allocation8 + $0x4] sm:$0xf]
    %v173 = vld [vmem:[#allocation8 + $0x8] sm:$0xf]
    %v174 = vld [vmem:[#allocation8 + $0xc] sm:$0xf]
    %v175 = vld [vmem:[#allocation8 + $0x10] sm:$0xf]
    %v176 = vld [vmem:[#allocation8 + $0x14] sm:$0xf]
    %v177 = vld [vmem:[#allocation8 + $0x18] sm:$0xf]
    %v178 = vld [vmem:[#allocation8 + $0x1c] sm:$0xf]
    %v179 = vld [vmem:[#allocation8 + $0x20] sm:$0xf]
    %v180 = vld [vmem:[#allocation8 + $0x24] sm:$0xf]
    %v181 = vld [vmem:[#allocation8 + $0x28] sm:$0xf]
    %v182 = vld [vmem:[#allocation8 + $0x2c] sm:$0xf]
    %v183 = vld [vmem:[#allocation8 + $0x30] sm:$0xf]
    %v184 = vld [vmem:[#allocation8 + $0x34] sm:$0xf]
    %v185 = vld [vmem:[#allocation8 + $0x38] sm:$0xf]
    %v186 = vld [vmem:[#allocation8 + $0x3c] sm:$0xf]
    %v187 = vld [vmem:[%s2] sm:$0x1]
    %v189 = vlaneseq
    %v190 = vshrl.u32 %v189, 7
    %v191 = vsub.s32 0, %v190
    %v192 = vrot.slane %v187, %v191
    %v210 = vunpack.c.l.b16 %v155
    %v211 = vunpack.c.l.b16 %v156
    %v212 = vunpack.c.l.b16 %v157
    %v213 = vunpack.c.l.b16 %v158
    %v214 = vunpack.c.l.b16 %v159
    %v215 = vunpack.c.l.b16 %v160
    %v216 = vunpack.c.l.b16 %v161
    %v217 = vunpack.c.l.b16 %v162
    %v218 = vunpack.c.l.b16 %v163
    %v219 = vunpack.c.l.b16 %v164
    %v220 = vunpack.c.l.b16 %v165
    %v221 = vunpack.c.l.b16 %v166
    %v222 = vunpack.c.l.b16 %v167
    %v223 = vunpack.c.l.b16 %v168
    %v224 = vunpack.c.l.b16 %v169
    %v225 = vunpack.c.l.b16 %v170
    %v226 = vpack.c.b16 %v211, %v210
    %v227 = vpack.c.b16 %v213, %v212
    %v228 = vpack.c.b16 %v215, %v214
    %v229 = vpack.c.b16 %v217, %v216
    %v230 = vpack.c.b16 %v219, %v218
    %v231 = vpack.c.b16 %v221, %v220
    %v232 = vpack.c.b16 %v223, %v222
    %v233 = vpack.c.b16 %v225, %v224
    %v258 = vunpack.c.l.b16 %v171
    %v259 = vunpack.c.l.b16 %v172
    %v260 = vunpack.c.l.b16 %v173
    %v261 = vunpack.c.l.b16 %v174
    %v262 = vunpack.c.l.b16 %v175
    %v263 = vunpack.c.l.b16 %v176
    %v264 = vunpack.c.l.b16 %v177
    %v265 = vunpack.c.l.b16 %v178
    %v266 = vunpack.c.l.b16 %v179
    %v267 = vunpack.c.l.b16 %v180
    %v268 = vunpack.c.l.b16 %v181
    %v269 = vunpack.c.l.b16 %v182
    %v270 = vunpack.c.l.b16 %v183
    %v271 = vunpack.c.l.b16 %v184
    %v272 = vunpack.c.l.b16 %v185
    %v273 = vunpack.c.l.b16 %v186
    %v274 = vpack.c.b16 %v259, %v258
    %v275 = vpack.c.b16 %v261, %v260
    %v276 = vpack.c.b16 %v263, %v262
    %v277 = vpack.c.b16 %v265, %v264
    %v278 = vpack.c.b16 %v267, %v266
    %v279 = vpack.c.b16 %v269, %v268
    %v280 = vpack.c.b16 %v271, %v270
    %v281 = vpack.c.b16 %v273, %v272
    %290 = vmatprep.subr.bf16.mxu0 0
    %291 = vmatpush1.bf16.msra.mxu0 %v274
    %292 = vmatprep.subr.bf16.mxu0 0
    %293 = vmatpush1.bf16.msra.mxu0 %v275
    %294 = vmatprep.subr.bf16.mxu0 0
    %295 = vmatpush1.bf16.msra.mxu0 %v276
    %296 = vmatprep.subr.bf16.mxu0 0
    %297 = vmatpush1.bf16.msra.mxu0 %v277
    %298 = vmatprep.subr.bf16.mxu0 0
    %299 = vmatpush1.bf16.msra.mxu0 %v278
    %300 = vmatprep.subr.bf16.mxu0 0
    %301 = vmatpush1.bf16.msra.mxu0 %v279
    %302 = vmatprep.subr.bf16.mxu0 0
    %303 = vmatpush1.bf16.msra.mxu0 %v280
    %304 = vmatprep.subr.bf16.mxu0 0
    %305 = vmatpush1.bf16.msra.mxu0 %v281
    %306 = vmatprep.subr.bf16.mxu0 0
    %307 = vmatpush1.bf16.msra.mxu0 0
    %308 = vmatprep.subr.bf16.mxu0 0
    %309 = vmatpush1.bf16.msra.mxu0 0
    %310 = vmatprep.subr.bf16.mxu0 0
    %311 = vmatpush1.bf16.msra.mxu0 0
    %312 = vmatprep.subr.bf16.mxu0 0
    %313 = vmatpush1.bf16.msra.mxu0 0
    %314 = vmatprep.subr.bf16.mxu0 0
    %315 = vmatpush1.bf16.msra.mxu0 0
    %316 = vmatprep.subr.bf16.mxu0 0
    %317 = vmatpush1.bf16.msra.mxu0 0
    %318 = vmatprep.subr.bf16.mxu0 0
    %319 = vmatpush1.bf16.msra.mxu0 0
    %320 = vmatprep.subr.bf16.mxu0 0
    %321 = vmatpush1.bf16.msra.mxu0 0
    %322 = vmatprep.mubr.bf16.mxu0 0
    %323 = vmatmul.mubr.bf16.gmra.mrb[0].mxu0 %v226
    %v324 = vpop.f32.mrb[0].mxu0
    %v325 = vadd.f32 %v192, %v324
    %v326 = vpop.f32.mrb[0].mxu0
    %v327 = vpop.f32.mrb[0].mxu0
    %v328 = vadd.f32 %v192, %v327
    %v329 = vpop.f32.mrb[0].mxu0
    %330 = vmatprep.mubr.bf16.mxu0 0
    %331 = vmatmul.mubr.bf16.gmra.mrb[0].mxu0 %v227
    %v332 = vpop.f32.mrb[0].mxu0
    %v333 = vadd.f32 %v192, %v332
    %v334 = vpop.f32.mrb[0].mxu0
    %v335 = vpop.f32.mrb[0].mxu0
    %v336 = vadd.f32 %v192, %v335
    %v337 = vpop.f32.mrb[0].mxu0
    %338 = vmatprep.mubr.bf16.mxu0 0
    %339 = vmatmul.mubr.bf16.gmra.mrb[0].mxu0 %v228
    %v340 = vpop.f32.mrb[0].mxu0
    %v341 = vadd.f32 %v192, %v340
    %v342 = vpop.f32.mrb[0].mxu0
    %v343 = vpop.f32.mrb[0].mxu0
    %v344 = vadd.f32 %v192, %v343
    %v345 = vpop.f32.mrb[0].mxu0
    %346 = vmatprep.mubr.bf16.mxu0 0
    %347 = vmatmul.mubr.bf16.gmra.mrb[0].mxu0 %v229
    %v348 = vpop.f32.mrb[0].mxu0
    %v349 = vadd.f32 %v192, %v348
    %v350 = vpop.f32.mrb[0].mxu0
    %v351 = vpop.f32.mrb[0].mxu0
    %v352 = vadd.f32 %v192, %v351
    %v353 = vpop.f32.mrb[0].mxu0
    %354 = vmatprep.mubr.bf16.mxu0 0
    %355 = vmatmul.mubr.bf16.gmra.mrb[0].mxu0 %v230
    %v356 = vpop.f32.mrb[0].mxu0
    %v357 = vadd.f32 %v192, %v356
    %v358 = vpop.f32.mrb[0].mxu0
    %v359 = vpop.f32.mrb[0].mxu0
    %v360 = vadd.f32 %v192, %v359
    %v361 = vpop.f32.mrb[0].mxu0
    %362 = vmatprep.mubr.bf16.mxu0 0
    %363 = vmatmul.mubr.bf16.gmra.mrb[0].mxu0 %v231
    %v364 = vpop.f32.mrb[0].mxu0
    %v365 = vadd.f32 %v192, %v364
    %v366 = vpop.f32.mrb[0].mxu0
    %v367 = vpop.f32.mrb[0].mxu0
    %v368 = vadd.f32 %v192, %v367
    %v369 = vpop.f32.mrb[0].mxu0
    %370 = vmatprep.mubr.bf16.mxu0 0
    %371 = vmatmul.mubr.bf16.gmra.mrb[0].mxu0 %v232
    %v372 = vpop.f32.mrb[0].mxu0
    %v373 = vadd.f32 %v192, %v372
    %v374 = vpop.f32.mrb[0].mxu0
    %v375 = vpop.f32.mrb[0].mxu0
    %v376 = vadd.f32 %v192, %v375
    %v377 = vpop.f32.mrb[0].mxu0
    %378 = vmatprep.mubr.bf16.mxu0 0
    %379 = vmatmul.mubr.bf16.gmra.mrb[0].mxu0 %v233
    %v380 = vpop.f32.mrb[0].mxu0
    %v381 = vadd.f32 %v192, %v380
    %v382 = vpop.f32.mrb[0].mxu0
    %v383 = vpop.f32.mrb[0].mxu0
    %v384 = vadd.f32 %v192, %v383
    %v385 = vpop.f32.mrb[0].mxu0
    %386 = vdwg.mxu0
    %v387 = vmax.f32 %v325, 0.0
    %v388 = vmax.f32 %v328, 0.0
    %v389 = vmax.f32 %v333, 0.0
    %v390 = vmax.f32 %v336, 0.0
    %v391 = vmax.f32 %v341, 0.0
    %v392 = vmax.f32 %v344, 0.0
    %v393 = vmax.f32 %v349, 0.0
    %v394 = vmax.f32 %v352, 0.0
    %v395 = vmax.f32 %v357, 0.0
    %v396 = vmax.f32 %v360, 0.0
    %v397 = vmax.f32 %v365, 0.0
    %v398 = vmax.f32 %v368, 0.0
    %v399 = vmax.f32 %v373, 0.0
    %v400 = vmax.f32 %v376, 0.0
    %v401 = vmax.f32 %v381, 0.0
    %v402 = vmax.f32 %v384, 0.0
    %v403 = vpack.c.bf16 %v388, %v387
    %v404 = vpack.c.bf16 %v390, %v389
    %v405 = vpack.c.bf16 %v392, %v391
    %v406 = vpack.c.bf16 %v394, %v393
    %v407 = vpack.c.bf16 %v396, %v395
    %v408 = vpack.c.bf16 %v398, %v397
    %v409 = vpack.c.bf16 %v400, %v399
    %v410 = vpack.c.bf16 %v402, %v401
    %v427 = vunpack.c.l.b16 %v123
    %v428 = vunpack.c.l.b16 %v124
    %v429 = vunpack.c.l.b16 %v125
    %v430 = vunpack.c.l.b16 %v126
    %v431 = vunpack.c.l.b16 %v127
    %v432 = vunpack.c.l.b16 %v128
    %v433 = vunpack.c.l.b16 %v129
    %v434 = vunpack.c.l.b16 %v130
    %v435 = vunpack.c.l.b16 %v131
    %v436 = vunpack.c.l.b16 %v132
    %v437 = vunpack.c.l.b16 %v133
    %v438 = vunpack.c.l.b16 %v134
    %v439 = vunpack.c.l.b16 %v135
    %v440 = vunpack.c.l.b16 %v136
    %v441 = vunpack.c.l.b16 %v137
    %v442 = vunpack.c.l.b16 %v138
    %v443 = vpack.c.b16 %v428, %v427
    %v444 = vpack.c.b16 %v430, %v429
    %v445 = vpack.c.b16 %v432, %v431
    %v446 = vpack.c.b16 %v434, %v433
    %v447 = vpack.c.b16 %v436, %v435
    %v448 = vpack.c.b16 %v438, %v437
    %v449 = vpack.c.b16 %v440, %v439
    %v450 = vpack.c.b16 %v442, %v441
    %459 = vmatprep.subr.bf16.mxu0 0
    %460 = vmatpush1.bf16.msra.mxu0 %v443
    %461 = vmatprep.subr.bf16.mxu0 0
    %462 = vmatpush1.bf16.msra.mxu0 %v444
    %463 = vmatprep.subr.bf16.mxu0 0
    %464 = vmatpush1.bf16.msra.mxu0 %v445
    %465 = vmatprep.subr.bf16.mxu0 0
    %466 = vmatpush1.bf16.msra.mxu0 %v446
    %467 = vmatprep.subr.bf16.mxu0 0
    %468 = vmatpush1.bf16.msra.mxu0 %v447
    %469 = vmatprep.subr.bf16.mxu0 0
    %470 = vmatpush1.bf16.msra.mxu0 %v448
    %471 = vmatprep.subr.bf16.mxu0 0
    %472 = vmatpush1.bf16.msra.mxu0 %v449
    %473 = vmatprep.subr.bf16.mxu0 0
    %474 = vmatpush1.bf16.msra.mxu0 %v450
    %475 = vmatprep.subr.bf16.mxu0 0
    %476 = vmatpush1.bf16.msra.mxu0 0
    %477 = vmatprep.subr.bf16.mxu0 0
    %478 = vmatpush1.bf16.msra.mxu0 0
    %479 = vmatprep.subr.bf16.mxu0 0
    %480 = vmatpush1.bf16.msra.mxu0 0
    %481 = vmatprep.subr.bf16.mxu0 0
    %482 = vmatpush1.bf16.msra.mxu0 0
    %483 = vmatprep.subr.bf16.mxu0 0
    %484 = vmatpush1.bf16.msra.mxu0 0
    %485 = vmatprep.subr.bf16.mxu0 0
    %486 = vmatpush1.bf16.msra.mxu0 0
    %487 = vmatprep.subr.bf16.mxu0 0
    %488 = vmatpush1.bf16.msra.mxu0 0
    %489 = vmatprep.subr.bf16.mxu0 0
    %490 = vmatpush1.bf16.msra.mxu0 0
    %491 = vmatprep.mubr.bf16.mxu0 0
    %492 = vmatmul.mubr.bf16.gmra.mrb[0].mxu0 %v403
    %v493 = vpop.f32.mrb[0].mxu0
    %v494 = vadd.f32 0.0, %v493
    %v495 = vpop.f32.mrb[0].mxu0
    %v496 = vpop.f32.mrb[0].mxu0
    %v497 = vadd.f32 0.0, %v496
    %v498 = vpop.f32.mrb[0].mxu0
    %499 = vmatprep.mubr.bf16.mxu0 0
    %500 = vmatmul.mubr.bf16.gmra.mrb[0].mxu0 %v404
    %v501 = vpop.f32.mrb[0].mxu0
    %v502 = vadd.f32 0.0, %v501
    %v503 = vpop.f32.mrb[0].mxu0
    %v504 = vpop.f32.mrb[0].mxu0
    %v505 = vadd.f32 0.0, %v504
    %v506 = vpop.f32.mrb[0].mxu0
    %507 = vmatprep.mubr.bf16.mxu0 0
    %508 = vmatmul.mubr.bf16.gmra.mrb[0].mxu0 %v405
    %v509 = vpop.f32.mrb[0].mxu0
    %v510 = vadd.f32 0.0, %v509
    %v511 = vpop.f32.mrb[0].mxu0
    %v512 = vpop.f32.mrb[0].mxu0
    %v513 = vadd.f32 0.0, %v512
    %v514 = vpop.f32.mrb[0].mxu0
    %515 = vmatprep.mubr.bf16.mxu0 0
    %516 = vmatmul.mubr.bf16.gmra.mrb[0].mxu0 %v406
    %v517 = vpop.f32.mrb[0].mxu0
    %v518 = vadd.f32 0.0, %v517
    %v519 = vpop.f32.mrb[0].mxu0
    %v520 = vpop.f32.mrb[0].mxu0
    %v521 = vadd.f32 0.0, %v520
    %v522 = vpop.f32.mrb[0].mxu0
    %523 = vmatprep.mubr.bf16.mxu0 0
    %524 = vmatmul.mubr.bf16.gmra.mrb[0].mxu0 %v407
    %v525 = vpop.f32.mrb[0].mxu0
    %v526 = vadd.f32 0.0, %v525
    %v527 = vpop.f32.mrb[0].mxu0
    %v528 = vpop.f32.mrb[0].mxu0
    %v529 = vadd.f32 0.0, %v528
    %v530 = vpop.f32.mrb[0].mxu0
    %531 = vmatprep.mubr.bf16.mxu0 0
    %532 = vmatmul.mubr.bf16.gmra.mrb[0].mxu0 %v408
    %v533 = vpop.f32.mrb[0].mxu0
    %v534 = vadd.f32 0.0, %v533
    %v535 = vpop.f32.mrb[0].mxu0
    %v536 = vpop.f32.mrb[0].mxu0
    %v537 = vadd.f32 0.0, %v536
    %v538 = vpop.f32.mrb[0].mxu0
    %539 = vmatprep.mubr.bf16.mxu0 0
    %540 = vmatmul.mubr.bf16.gmra.mrb[0].mxu0 %v409
    %v541 = vpop.f32.mrb[0].mxu0
    %v542 = vadd.f32 0.0, %v541
    %v543 = vpop.f32.mrb[0].mxu0
    %v544 = vpop.f32.mrb[0].mxu0
    %v545 = vadd.f32 0.0, %v544
    %v546 = vpop.f32.mrb[0].mxu0
    %547 = vmatprep.mubr.bf16.mxu0 0
    %548 = vmatmul.mubr.bf16.gmra.mrb[0].mxu0 %v410
    %v549 = vpop.f32.mrb[0].mxu0
    %v550 = vadd.f32 0.0, %v549
    %v551 = vpop.f32.mrb[0].mxu0
    %v552 = vpop.f32.mrb[0].mxu0
    %v553 = vadd.f32 0.0, %v552
    %v554 = vpop.f32.mrb[0].mxu0
    %555 = vdwg.mxu0
    %v556 = vpack.c.bf16 %v497, %v494
    %v557 = vpack.c.bf16 %v505, %v502
    %v558 = vpack.c.bf16 %v513, %v510
    %v559 = vpack.c.bf16 %v521, %v518
    %v560 = vpack.c.bf16 %v529, %v526
    %v561 = vpack.c.bf16 %v537, %v534
    %v562 = vpack.c.bf16 %v545, %v542
    %v563 = vpack.c.bf16 %v553, %v550
    %s564 = smul.u32 4, 16
    %s565 = smul.u32 %s564, 1
    %s566 = sshll.u32 %s565, 4
    %567 = dma.done [#allocation4], %s566
    %v568 = vld [vmem:[#allocation3] sm:$0xff]
    %v569 = vld [vmem:[#allocation3 + $0x8] sm:$0xff]
    %v570 = vld [vmem:[#allocation3 + $0x10] sm:$0xff]
    %v571 = vld [vmem:[#allocation3 + $0x18] sm:$0xff]
    %v572 = vld [vmem:[#allocation3 + $0x20] sm:$0xff]
    %v573 = vld [vmem:[#allocation3 + $0x28] sm:$0xff]
    %v574 = vld [vmem:[#allocation3 + $0x30] sm:$0xff]
    %v575 = vld [vmem:[#allocation3 + $0x38] sm:$0xff]
    %576 = vmatprep.subr.bf16.mxu0 0
    %577 = vmatpush1.bf16.msra.mxu0 %v556
    %578 = vmatprep.subr.bf16.mxu0 0
    %579 = vmatpush1.bf16.msra.mxu0 %v557
    %580 = vmatprep.subr.bf16.mxu0 0
    %581 = vmatpush1.bf16.msra.mxu0 %v558
    %582 = vmatprep.subr.bf16.mxu0 0
    %583 = vmatpush1.bf16.msra.mxu0 %v559
    %584 = vmatprep.subr.bf16.mxu0 0
    %585 = vmatpush1.bf16.msra.mxu0 %v560
    %586 = vmatprep.subr.bf16.mxu0 0
    %587 = vmatpush1.bf16.msra.mxu0 %v561
    %588 = vmatprep.subr.bf16.mxu0 0
    %589 = vmatpush1.bf16.msra.mxu0 %v562
    %590 = vmatprep.subr.bf16.mxu0 0
    %591 = vmatpush1.bf16.msra.mxu0 %v563
    %592 = vmatprep.subr.bf16.mxu0 0
    %593 = vmatpush1.bf16.msra.mxu0 0
    %594 = vmatprep.subr.bf16.mxu0 0
    %595 = vmatpush1.bf16.msra.mxu0 0
    %596 = vmatprep.subr.bf16.mxu0 0
    %597 = vmatpush1.bf16.msra.mxu0 0
    %598 = vmatprep.subr.bf16.mxu0 0
    %599 = vmatpush1.bf16.msra.mxu0 0
    %600 = vmatprep.subr.bf16.mxu0 0
    %601 = vmatpush1.bf16.msra.mxu0 0
    %602 = vmatprep.subr.bf16.mxu0 0
    %603 = vmatpush1.bf16.msra.mxu0 0
    %604 = vmatprep.subr.bf16.mxu0 0
    %605 = vmatpush1.bf16.msra.mxu0 0
    %606 = vmatprep.subr.bf16.mxu0 0
    %607 = vmatpush1.bf16.msra.mxu0 0
    %608 = vmatprep.mubr.bf16.mxu0 0
    %609 = vmatmul.mubr.bf16.gmra.mrb[0].mxu0 %v568
    %v610 = vpop.f32.mrb[0].mxu0
    %v611 = vadd.f32 0.0, %v610
    %v612 = vpop.f32.mrb[0].mxu0
    %v613 = vpop.f32.mrb[0].mxu0
    %v614 = vadd.f32 0.0, %v613
    %v615 = vpop.f32.mrb[0].mxu0
    %616 = vmatprep.mubr.bf16.mxu0 0
    %617 = vmatmul.mubr.bf16.gmra.mrb[0].mxu0 %v569
    %v618 = vpop.f32.mrb[0].mxu0
    %v619 = vadd.f32 0.0, %v618
    %v620 = vpop.f32.mrb[0].mxu0
    %v621 = vpop.f32.mrb[0].mxu0
    %v622 = vadd.f32 0.0, %v621
    %v623 = vpop.f32.mrb[0].mxu0
    %624 = vmatprep.mubr.bf16.mxu0 0
    %625 = vmatmul.mubr.bf16.gmra.mrb[0].mxu0 %v570
    %v626 = vpop.f32.mrb[0].mxu0
    %v627 = vadd.f32 0.0, %v626
    %v628 = vpop.f32.mrb[0].mxu0
    %v629 = vpop.f32.mrb[0].mxu0
    %v630 = vadd.f32 0.0, %v629
    %v631 = vpop.f32.mrb[0].mxu0
    %632 = vmatprep.mubr.bf16.mxu0 0
    %633 = vmatmul.mubr.bf16.gmra.mrb[0].mxu0 %v571
    %v634 = vpop.f32.mrb[0].mxu0
    %v635 = vadd.f32 0.0, %v634
    %v636 = vpop.f32.mrb[0].mxu0
    %v637 = vpop.f32.mrb[0].mxu0
    %v638 = vadd.f32 0.0, %v637
    %v639 = vpop.f32.mrb[0].mxu0
    %640 = vmatprep.mubr.bf16.mxu0 0
    %641 = vmatmul.mubr.bf16.gmra.mrb[0].mxu0 %v572
    %v642 = vpop.f32.mrb[0].mxu0
    %v643 = vadd.f32 0.0, %v642
    %v644 = vpop.f32.mrb[0].mxu0
    %v645 = vpop.f32.mrb[0].mxu0
    %v646 = vadd.f32 0.0, %v645
    %v647 = vpop.f32.mrb[0].mxu0
    %648 = vmatprep.mubr.bf16.mxu0 0
    %649 = vmatmul.mubr.bf16.gmra.mrb[0].mxu0 %v573
    %v650 = vpop.f32.mrb[0].mxu0
    %v651 = vadd.f32 0.0, %v650
    %v652 = vpop.f32.mrb[0].mxu0
    %v653 = vpop.f32.mrb[0].mxu0
    %v654 = vadd.f32 0.0, %v653
    %v655 = vpop.f32.mrb[0].mxu0
    %656 = vmatprep.mubr.bf16.mxu0 0
    %657 = vmatmul.mubr.bf16.gmra.mrb[0].mxu0 %v574
    %v658 = vpop.f32.mrb[0].mxu0
    %v659 = vadd.f32 0.0, %v658
    %v660 = vpop.f32.mrb[0].mxu0
    %v661 = vpop.f32.mrb[0].mxu0
    %v662 = vadd.f32 0.0, %v661
    %v663 = vpop.f32.mrb[0].mxu0
    %664 = vmatprep.mubr.bf16.mxu0 0
    %665 = vmatmul.mubr.bf16.gmra.mrb[0].mxu0 %v575
    %v666 = vpop.f32.mrb[0].mxu0
    %v667 = vadd.f32 0.0, %v666
    %v668 = vpop.f32.mrb[0].mxu0
    %v669 = vpop.f32.mrb[0].mxu0
    %v670 = vadd.f32 0.0, %v669
    %v671 = vpop.f32.mrb[0].mxu0
    %672 = vdwg.mxu0
    %673 = vst [vmem:[#allocation2] sm:$0xff] %v611
    %674 = vst [vmem:[#allocation2 + $0x8] sm:$0xff] %v614
    %675 = vst [vmem:[#allocation2 + $0x10] sm:$0xff] %v619
    %676 = vst [vmem:[#allocation2 + $0x18] sm:$0xff] %v622
    %677 = vst [vmem:[#allocation2 + $0x20] sm:$0xff] %v627
    %678 = vst [vmem:[#allocation2 + $0x28] sm:$0xff] %v630
    %679 = vst [vmem:[#allocation2 + $0x30] sm:$0xff] %v635
    %680 = vst [vmem:[#allocation2 + $0x38] sm:$0xff] %v638
    %681 = vst [vmem:[#allocation2 + $0x40] sm:$0xff] %v643
    %682 = vst [vmem:[#allocation2 + $0x48] sm:$0xff] %v646
    %683 = vst [vmem:[#allocation2 + $0x50] sm:$0xff] %v651
    %684 = vst [vmem:[#allocation2 + $0x58] sm:$0xff] %v654
    %685 = vst [vmem:[#allocation2 + $0x60] sm:$0xff] %v659
    %686 = vst [vmem:[#allocation2 + $0x68] sm:$0xff] %v662
    %687 = vst [vmem:[#allocation2 + $0x70] sm:$0xff] %v667
    %688 = vst [vmem:[#allocation2 + $0x78] sm:$0xff] %v670
    %v689 = vld [vmem:[#allocation2] sm:$0xff]
    %v690 = vld [vmem:[#allocation2 + $0x8] sm:$0xff]
    %v691 = vld [vmem:[#allocation2 + $0x10] sm:$0xff]
    %v692 = vld [vmem:[#allocation2 + $0x18] sm:$0xff]
    %v693 = vld [vmem:[#allocation2 + $0x20] sm:$0xff]
    %v694 = vld [vmem:[#allocation2 + $0x28] sm:$0xff]
    %v695 = vld [vmem:[#allocation2 + $0x30] sm:$0xff]
    %v696 = vld [vmem:[#allocation2 + $0x38] sm:$0xff]
    %v697 = vld [vmem:[#allocation2 + $0x40] sm:$0xff]
    %v698 = vld [vmem:[#allocation2 + $0x48] sm:$0xff]
    %v699 = vld [vmem:[#allocation2 + $0x50] sm:$0xff]
    %v700 = vld [vmem:[#allocation2 + $0x58] sm:$0xff]
    %v701 = vld [vmem:[#allocation2 + $0x60] sm:$0xff]
    %v702 = vld [vmem:[#allocation2 + $0x68] sm:$0xff]
    %v703 = vld [vmem:[#allocation2 + $0x70] sm:$0xff]
    %v704 = vld [vmem:[#allocation2 + $0x78] sm:$0xff]
    %v721 = vunpack.c.l.b16 %v139
    %v722 = vunpack.c.l.b16 %v140
    %v723 = vunpack.c.l.b16 %v141
    %v724 = vunpack.c.l.b16 %v142
    %v725 = vunpack.c.l.b16 %v143
    %v726 = vunpack.c.l.b16 %v144
    %v727 = vunpack.c.l.b16 %v145
    %v728 = vunpack.c.l.b16 %v146
    %v729 = vunpack.c.l.b16 %v147
    %v730 = vunpack.c.l.b16 %v148
    %v731 = vunpack.c.l.b16 %v149
    %v732 = vunpack.c.l.b16 %v150
    %v733 = vunpack.c.l.b16 %v151
    %v734 = vunpack.c.l.b16 %v152
    %v735 = vunpack.c.l.b16 %v153
    %v736 = vunpack.c.l.b16 %v154
    %v737 = vpack.c.b16 %v722, %v721
    %v738 = vpack.c.b16 %v724, %v723
    %v739 = vpack.c.b16 %v726, %v725
    %v740 = vpack.c.b16 %v728, %v727
    %v741 = vpack.c.b16 %v730, %v729
    %v742 = vpack.c.b16 %v732, %v731
    %v743 = vpack.c.b16 %v734, %v733
    %v744 = vpack.c.b16 %v736, %v735
    %753 = vmatprep.subr.bf16.mxu0 0
    %754 = vmatpush1.bf16.msra.mxu0 %v737
    %755 = vmatprep.subr.bf16.mxu0 0
    %756 = vmatpush1.bf16.msra.mxu0 %v738
    %757 = vmatprep.subr.bf16.mxu0 0
    %758 = vmatpush1.bf16.msra.mxu0 %v739
    %759 = vmatprep.subr.bf16.mxu0 0
    %760 = vmatpush1.bf16.msra.mxu0 %v740
    %761 = vmatprep.subr.bf16.mxu0 0
    %762 = vmatpush1.bf16.msra.mxu0 %v741
    %763 = vmatprep.subr.bf16.mxu0 0
    %764 = vmatpush1.bf16.msra.mxu0 %v742
    %765 = vmatprep.subr.bf16.mxu0 0
    %766 = vmatpush1.bf16.msra.mxu0 %v743
    %767 = vmatprep.subr.bf16.mxu0 0
    %768 = vmatpush1.bf16.msra.mxu0 %v744
    %769 = vmatprep.subr.bf16.mxu0 0
    %770 = vmatpush1.bf16.msra.mxu0 0
    %771 = vmatprep.subr.bf16.mxu0 0
    %772 = vmatpush1.bf16.msra.mxu0 0
    %773 = vmatprep.subr.bf16.mxu0 0
    %774 = vmatpush1.bf16.msra.mxu0 0
    %775 = vmatprep.subr.bf16.mxu0 0
    %776 = vmatpush1.bf16.msra.mxu0 0
    %777 = vmatprep.subr.bf16.mxu0 0
    %778 = vmatpush1.bf16.msra.mxu0 0
    %779 = vmatprep.subr.bf16.mxu0 0
    %780 = vmatpush1.bf16.msra.mxu0 0
    %781 = vmatprep.subr.bf16.mxu0 0
    %782 = vmatpush1.bf16.msra.mxu0 0
    %783 = vmatprep.subr.bf16.mxu0 0
    %784 = vmatpush1.bf16.msra.mxu0 0
    %785 = vmatprep.mubr.bf16.mxu0 0
    %786 = vmatmul.mubr.bf16.gmra.mrb[0].mxu0 %v556
    %v787 = vpop.f32.mrb[0].mxu0
    %v788 = vadd.f32 0.0, %v787
    %v789 = vpop.f32.mrb[0].mxu0
    %v790 = vpop.f32.mrb[0].mxu0
    %v791 = vadd.f32 0.0, %v790
    %v792 = vpop.f32.mrb[0].mxu0
    %793 = vmatprep.mubr.bf16.mxu0 0
    %794 = vmatmul.mubr.bf16.gmra.mrb[0].mxu0 %v557
    %v795 = vpop.f32.mrb[0].mxu0
    %v796 = vadd.f32 0.0, %v795
    %v797 = vpop.f32.mrb[0].mxu0
    %v798 = vpop.f32.mrb[0].mxu0
    %v799 = vadd.f32 0.0, %v798
    %v800 = vpop.f32.mrb[0].mxu0
    %801 = vmatprep.mubr.bf16.mxu0 0
    %802 = vmatmul.mubr.bf16.gmra.mrb[0].mxu0 %v558
    %v803 = vpop.f32.mrb[0].mxu0
    %v804 = vadd.f32 0.0, %v803
    %v805 = vpop.f32.mrb[0].mxu0
    %v806 = vpop.f32.mrb[0].mxu0
    %v807 = vadd.f32 0.0, %v806
    %v808 = vpop.f32.mrb[0].mxu0
    %809 = vmatprep.mubr.bf16.mxu0 0
    %810 = vmatmul.mubr.bf16.gmra.mrb[0].mxu0 %v559
    %v811 = vpop.f32.mrb[0].mxu0
    %v812 = vadd.f32 0.0, %v811
    %v813 = vpop.f32.mrb[0].mxu0
    %v814 = vpop.f32.mrb[0].mxu0
    %v815 = vadd.f32 0.0, %v814
    %v816 = vpop.f32.mrb[0].mxu0
    %817 = vmatprep.mubr.bf16.mxu0 0
    %818 = vmatmul.mubr.bf16.gmra.mrb[0].mxu0 %v560
    %v819 = vpop.f32.mrb[0].mxu0
    %v820 = vadd.f32 0.0, %v819
    %v821 = vpop.f32.mrb[0].mxu0
    %v822 = vpop.f32.mrb[0].mxu0
    %v823 = vadd.f32 0.0, %v822
    %v824 = vpop.f32.mrb[0].mxu0
    %825 = vmatprep.mubr.bf16.mxu0 0
    %826 = vmatmul.mubr.bf16.gmra.mrb[0].mxu0 %v561
    %v827 = vpop.f32.mrb[0].mxu0
    %v828 = vadd.f32 0.0, %v827
    %v829 = vpop.f32.mrb[0].mxu0
    %v830 = vpop.f32.mrb[0].mxu0
    %v831 = vadd.f32 0.0, %v830
    %v832 = vpop.f32.mrb[0].mxu0
    %833 = vmatprep.mubr.bf16.mxu0 0
    %834 = vmatmul.mubr.bf16.gmra.mrb[0].mxu0 %v562
    %v835 = vpop.f32.mrb[0].mxu0
    %v836 = vadd.f32 0.0, %v835
    %v837 = vpop.f32.mrb[0].mxu0
    %v838 = vpop.f32.mrb[0].mxu0
    %v839 = vadd.f32 0.0, %v838
    %v840 = vpop.f32.mrb[0].mxu0
    %841 = vmatprep.mubr.bf16.mxu0 0
    %842 = vmatmul.mubr.bf16.gmra.mrb[0].mxu0 %v563
    %v843 = vpop.f32.mrb[0].mxu0
    %v844 = vadd.f32 0.0, %v843
    %v845 = vpop.f32.mrb[0].mxu0
    %v846 = vpop.f32.mrb[0].mxu0
    %v847 = vadd.f32 0.0, %v846
    %v848 = vpop.f32.mrb[0].mxu0
    %849 = vdwg.mxu0
    %v850 = vsub.f32 %v689, %v788
    %v851 = vsub.f32 %v690, %v791
    %v852 = vsub.f32 %v691, %v796
    %v853 = vsub.f32 %v692, %v799
    %v854 = vsub.f32 %v693, %v804
    %v855 = vsub.f32 %v694, %v807
    %v856 = vsub.f32 %v695, %v812
    %v857 = vsub.f32 %v696, %v815
    %v858 = vsub.f32 %v697, %v820
    %v859 = vsub.f32 %v698, %v823
    %v860 = vsub.f32 %v699, %v828
    %v861 = vsub.f32 %v700, %v831
    %v862 = vsub.f32 %v701, %v836
    %v863 = vsub.f32 %v702, %v839
    %v864 = vsub.f32 %v703, %v844
    %v865 = vsub.f32 %v704, %v847
    %v866 = vadd.f32 %v850, %v121
    %v867 = vadd.f32 %v851, %v121
    %v868 = vadd.f32 %v852, %v121
    %v869 = vadd.f32 %v853, %v121
    %v870 = vadd.f32 %v854, %v121
    %v871 = vadd.f32 %v855, %v121
    %v872 = vadd.f32 %v856, %v121
    %v873 = vadd.f32 %v857, %v121
    %v874 = vadd.f32 %v858, %v121
    %v875 = vadd.f32 %v859, %v121
    %v876 = vadd.f32 %v860, %v121
    %v877 = vadd.f32 %v861, %v121
    %v878 = vadd.f32 %v862, %v121
    %v879 = vadd.f32 %v863, %v121
    %v880 = vadd.f32 %v864, %v121
    %v881 = vadd.f32 %v865, %v121
    %v882 = vmax.f32 %v866, 0.0
    %v883 = vmax.f32 %v867, 0.0
    %v884 = vmax.f32 %v868, 0.0
    %v885 = vmax.f32 %v869, 0.0
    %v886 = vmax.f32 %v870, 0.0
    %v887 = vmax.f32 %v871, 0.0
    %v888 = vmax.f32 %v872, 0.0
    %v889 = vmax.f32 %v873, 0.0
    %v890 = vmax.f32 %v874, 0.0
    %v891 = vmax.f32 %v875, 0.0
    %v892 = vmax.f32 %v876, 0.0
    %v893 = vmax.f32 %v877, 0.0
    %v894 = vmax.f32 %v878, 0.0
    %v895 = vmax.f32 %v879, 0.0
    %v896 = vmax.f32 %v880, 0.0
    %v897 = vmax.f32 %v881, 0.0
    %v898 = vmul.f32 %v387, 0.0
    %v899 = vmul.f32 %v388, 0.0
    %v900 = vmul.f32 %v389, 0.0
    %v901 = vmul.f32 %v390, 0.0
    %v902 = vmul.f32 %v391, 0.0
    %v903 = vmul.f32 %v392, 0.0
    %v904 = vmul.f32 %v393, 0.0
    %v905 = vmul.f32 %v394, 0.0
    %v906 = vmul.f32 %v395, 0.0
    %v907 = vmul.f32 %v396, 0.0
    %v908 = vmul.f32 %v397, 0.0
    %v909 = vmul.f32 %v398, 0.0
    %v910 = vmul.f32 %v399, 0.0
    %v911 = vmul.f32 %v400, 0.0
    %v912 = vmul.f32 %v401, 0.0
    %v913 = vmul.f32 %v402, 0.0
    %v914 = vadd.f32 %v898, %v882
    %v915 = vadd.f32 %v899, %v883
    %v916 = vadd.f32 %v900, %v884
    %v917 = vadd.f32 %v901, %v885
    %v918 = vadd.f32 %v902, %v886
    %v919 = vadd.f32 %v903, %v887
    %v920 = vadd.f32 %v904, %v888
    %v921 = vadd.f32 %v905, %v889
    %v922 = vadd.f32 %v906, %v890
    %v923 = vadd.f32 %v907, %v891
    %v924 = vadd.f32 %v908, %v892
    %v925 = vadd.f32 %v909, %v893
    %v926 = vadd.f32 %v910, %v894
    %v927 = vadd.f32 %v911, %v895
    %v928 = vadd.f32 %v912, %v896
    %v929 = vadd.f32 %v913, %v897
    %v930 = vsub.f32 %v914, %v387
    %v931 = vsub.f32 %v915, %v388
    %v932 = vsub.f32 %v916, %v389
    %v933 = vsub.f32 %v917, %v390
    %v934 = vsub.f32 %v918, %v391
    %v935 = vsub.f32 %v919, %v392
    %v936 = vsub.f32 %v920, %v393
    %v937 = vsub.f32 %v921, %v394
    %v938 = vsub.f32 %v922, %v395
    %v939 = vsub.f32 %v923, %v396
    %v940 = vsub.f32 %v924, %v397
    %v941 = vsub.f32 %v925, %v398
    %v942 = vsub.f32 %v926, %v399
    %v943 = vsub.f32 %v927, %v400
    %v944 = vsub.f32 %v928, %v401
    %v945 = vsub.f32 %v929, %v402
    %v946 = vadd.f32 %v387, %v930
    %v947 = vadd.f32 %v388, %v931
    %v948 = vadd.f32 %v389, %v932
    %v949 = vadd.f32 %v390, %v933
    %v950 = vadd.f32 %v391, %v934
    %v951 = vadd.f32 %v392, %v935
    %v952 = vadd.f32 %v393, %v936
    %v953 = vadd.f32 %v394, %v937
    %v954 = vadd.f32 %v395, %v938
    %v955 = vadd.f32 %v396, %v939
    %v956 = vadd.f32 %v397, %v940
    %v957 = vadd.f32 %v398, %v941
    %v958 = vadd.f32 %v399, %v942
    %v959 = vadd.f32 %v400, %v943
    %v960 = vadd.f32 %v401, %v944
    %v961 = vadd.f32 %v402, %v945
    %v962 = vpack.c.bf16 %v947, %v946
    %v963 = vpack.c.bf16 %v949, %v948
    %v964 = vpack.c.bf16 %v951, %v950
    %v965 = vpack.c.bf16 %v953, %v952
    %v966 = vpack.c.bf16 %v955, %v954
    %v967 = vpack.c.bf16 %v957, %v956
    %v968 = vpack.c.bf16 %v959, %v958
    %v969 = vpack.c.bf16 %v961, %v960
    %970 = vmatprep.subr.bf16.mxu0 0
    %971 = vmatpush1.bf16.msra.mxu0 %v443
    %972 = vmatprep.subr.bf16.mxu0 0
    %973 = vmatpush1.bf16.msra.mxu0 %v444
    %974 = vmatprep.subr.bf16.mxu0 0
    %975 = vmatpush1.bf16.msra.mxu0 %v445
    %976 = vmatprep.subr.bf16.mxu0 0
    %977 = vmatpush1.bf16.msra.mxu0 %v446
    %978 = vmatprep.subr.bf16.mxu0 0
    %979 = vmatpush1.bf16.msra.mxu0 %v447
    %980 = vmatprep.subr.bf16.mxu0 0
    %981 = vmatpush1.bf16.msra.mxu0 %v448
    %982 = vmatprep.subr.bf16.mxu0 0
    %983 = vmatpush1.bf16.msra.mxu0 %v449
    %984 = vmatprep.subr.bf16.mxu0 0
    %985 = vmatpush1.bf16.msra.mxu0 %v450
    %986 = vmatprep.subr.bf16.mxu0 0
    %987 = vmatpush1.bf16.msra.mxu0 0
    %988 = vmatprep.subr.bf16.mxu0 0
    %989 = vmatpush1.bf16.msra.mxu0 0
    %990 = vmatprep.subr.bf16.mxu0 0
    %991 = vmatpush1.bf16.msra.mxu0 0
    %992 = vmatprep.subr.bf16.mxu0 0
    %993 = vmatpush1.bf16.msra.mxu0 0
    %994 = vmatprep.subr.bf16.mxu0 0
    %995 = vmatpush1.bf16.msra.mxu0 0
    %996 = vmatprep.subr.bf16.mxu0 0
    %997 = vmatpush1.bf16.msra.mxu0 0
    %998 = vmatprep.subr.bf16.mxu0 0
    %999 = vmatpush1.bf16.msra.mxu0 0
    %1000 = vmatprep.subr.bf16.mxu0 0
    %1001 = vmatpush1.bf16.msra.mxu0 0
    %1002 = vmatprep.mubr.bf16.mxu0 0
    %1003 = vmatmul.mubr.bf16.gmra.mrb[0].mxu0 %v962
    %v1004 = vpop.f32.mrb[0].mxu0
    %v1005 = vadd.f32 0.0, %v1004
    %v1006 = vpop.f32.mrb[0].mxu0
    %v1007 = vpop.f32.mrb[0].mxu0
    %v1008 = vadd.f32 0.0, %v1007
    %v1009 = vpop.f32.mrb[0].mxu0
    %1010 = vmatprep.mubr.bf16.mxu0 0
    %1011 = vmatmul.mubr.bf16.gmra.mrb[0].mxu0 %v963
    %v1012 = vpop.f32.mrb[0].mxu0
    %v1013 = vadd.f32 0.0, %v1012
    %v1014 = vpop.f32.mrb[0].mxu0
    %v1015 = vpop.f32.mrb[0].mxu0
    %v1016 = vadd.f32 0.0, %v1015
    %v1017 = vpop.f32.mrb[0].mxu0
    %1018 = vmatprep.mubr.bf16.mxu0 0
    %1019 = vmatmul.mubr.bf16.gmra.mrb[0].mxu0 %v964
    %v1020 = vpop.f32.mrb[0].mxu0
    %v1021 = vadd.f32 0.0, %v1020
    %v1022 = vpop.f32.mrb[0].mxu0
    %v1023 = vpop.f32.mrb[0].mxu0
    %v1024 = vadd.f32 0.0, %v1023
    %v1025 = vpop.f32.mrb[0].mxu0
    %1026 = vmatprep.mubr.bf16.mxu0 0
    %1027 = vmatmul.mubr.bf16.gmra.mrb[0].mxu0 %v965
    %v1028 = vpop.f32.mrb[0].mxu0
    %v1029 = vadd.f32 0.0, %v1028
    %v1030 = vpop.f32.mrb[0].mxu0
    %v1031 = vpop.f32.mrb[0].mxu0
    %v1032 = vadd.f32 0.0, %v1031
    %v1033 = vpop.f32.mrb[0].mxu0
    %1034 = vmatprep.mubr.bf16.mxu0 0
    %1035 = vmatmul.mubr.bf16.gmra.mrb[0].mxu0 %v966
    %v1036 = vpop.f32.mrb[0].mxu0
    %v1037 = vadd.f32 0.0, %v1036
    %v1038 = vpop.f32.mrb[0].mxu0
    %v1039 = vpop.f32.mrb[0].mxu0
    %v1040 = vadd.f32 0.0, %v1039
    %v1041 = vpop.f32.mrb[0].mxu0
    %1042 = vmatprep.mubr.bf16.mxu0 0
    %1043 = vmatmul.mubr.bf16.gmra.mrb[0].mxu0 %v967
    %v1044 = vpop.f32.mrb[0].mxu0
    %v1045 = vadd.f32 0.0, %v1044
    %v1046 = vpop.f32.mrb[0].mxu0
    %v1047 = vpop.f32.mrb[0].mxu0
    %v1048 = vadd.f32 0.0, %v1047
    %v1049 = vpop.f32.mrb[0].mxu0
    %1050 = vmatprep.mubr.bf16.mxu0 0
    %1051 = vmatmul.mubr.bf16.gmra.mrb[0].mxu0 %v968
    %v1052 = vpop.f32.mrb[0].mxu0
    %v1053 = vadd.f32 0.0, %v1052
    %v1054 = vpop.f32.mrb[0].mxu0
    %v1055 = vpop.f32.mrb[0].mxu0
    %v1056 = vadd.f32 0.0, %v1055
    %v1057 = vpop.f32.mrb[0].mxu0
    %1058 = vmatprep.mubr.bf16.mxu0 0
    %1059 = vmatmul.mubr.bf16.gmra.mrb[0].mxu0 %v969
    %v1060 = vpop.f32.mrb[0].mxu0
    %v1061 = vadd.f32 0.0, %v1060
    %v1062 = vpop.f32.mrb[0].mxu0
    %v1063 = vpop.f32.mrb[0].mxu0
    %v1064 = vadd.f32 0.0, %v1063
    %v1065 = vpop.f32.mrb[0].mxu0
    %1066 = vdwg.mxu0
    %v1067 = vpack.c.bf16 %v1008, %v1005
    %v1068 = vpack.c.bf16 %v1016, %v1013
    %v1069 = vpack.c.bf16 %v1024, %v1021
    %v1070 = vpack.c.bf16 %v1032, %v1029
    %v1071 = vpack.c.bf16 %v1040, %v1037
    %v1072 = vpack.c.bf16 %v1048, %v1045
    %v1073 = vpack.c.bf16 %v1056, %v1053
    %v1074 = vpack.c.bf16 %v1064, %v1061
    // Predicated region
    $region62: #{tpu_custom_call.1} parent=1 // pred_check
      _
    $region63: #{tpu_custom_call.1} parent=1 // pred_check_branch
      %1076 = sbr.rel target = $region65
    $region64: #{tpu_custom_call.1} parent=1 // pred_region
      %1077 = sst [smem:[#allocation17]] [#allocation20]
      %1078 = sst [smem:[#allocation18]] [#allocation19]
    $region65: #{tpu_custom_call.1} parent=1 // pred_fallthru
      _
    %1080 = shalt.err (0)
    %s1082 = sshll.u32 [#allocation3], 4
    %s1083 = int_to_ptr.vmem [resolvable:$true] %s1082
    %1085 = dma.hbm_to_vmem [thread:$0]  %s9, 1024, %s1083, [#allocation4]
    %s1086 = sshll.u32 %s565, 4
    %1087 = dma.done [#allocation4], %s1086
    %v1088 = vld [vmem:[#allocation3] sm:$0xff]
    %v1089 = vld [vmem:[#allocation3 + $0x8] sm:$0xff]
    %v1090 = vld [vmem:[#allocation3 + $0x10] sm:$0xff]
    %v1091 = vld [vmem:[#allocation3 + $0x18] sm:$0xff]
    %v1092 = vld [vmem:[#allocation3 + $0x20] sm:$0xff]
    %v1093 = vld [vmem:[#allocation3 + $0x28] sm:$0xff]
    %v1094 = vld [vmem:[#allocation3 + $0x30] sm:$0xff]
    %v1095 = vld [vmem:[#allocation3 + $0x38] sm:$0xff]
    %1096 = vmatprep.subr.bf16.mxu0 0
    %1097 = vmatpush1.bf16.msra.mxu0 %v1067
    %1098 = vmatprep.subr.bf16.mxu0 0
    %1099 = vmatpush1.bf16.msra.mxu0 %v1068
    %1100 = vmatprep.subr.bf16.mxu0 0
    %1101 = vmatpush1.bf16.msra.mxu0 %v1069
    %1102 = vmatprep.subr.bf16.mxu0 0
    %1103 = vmatpush1.bf16.msra.mxu0 %v1070
    %1104 = vmatprep.subr.bf16.mxu0 0
    %1105 = vmatpush1.bf16.msra.mxu0 %v1071
    %1106 = vmatprep.subr.bf16.mxu0 0
    %1107 = vmatpush1.bf16.msra.mxu0 %v1072
    %1108 = vmatprep.subr.bf16.mxu0 0
    %1109 = vmatpush1.bf16.msra.mxu0 %v1073
    %1110 = vmatprep.subr.bf16.mxu0 0
    %1111 = vmatpush1.bf16.msra.mxu0 %v1074
    %1112 = vmatprep.subr.bf16.mxu0 0
    %1113 = vmatpush1.bf16.msra.mxu0 0
    %1114 = vmatprep.subr.bf16.mxu0 0
    %1115 = vmatpush1.bf16.msra.mxu0 0
    %1116 = vmatprep.subr.bf16.mxu0 0
    %1117 = vmatpush1.bf16.msra.mxu0 0
    %1118 = vmatprep.subr.bf16.mxu0 0
    %1119 = vmatpush1.bf16.msra.mxu0 0
    %1120 = vmatprep.subr.bf16.mxu0 0
    %1121 = vmatpush1.bf16.msra.mxu0 0
    %1122 = vmatprep.subr.bf16.mxu0 0
    %1123 = vmatpush1.bf16.msra.mxu0 0
    %1124 = vmatprep.subr.bf16.mxu0 0
    %1125 = vmatpush1.bf16.msra.mxu0 0
    %1126 = vmatprep.subr.bf16.mxu0 0
    %1127 = vmatpush1.bf16.msra.mxu0 0
    %1128 = vmatprep.mubr.bf16.mxu0 0
    %1129 = vmatmul.mubr.bf16.gmra.mrb[0].mxu0 %v1088
    %v1130 = vpop.f32.mrb[0].mxu0
    %v1131 = vadd.f32 0.0, %v1130
    %v1132 = vpop.f32.mrb[0].mxu0
    %v1133 = vpop.f32.mrb[0].mxu0
    %v1134 = vadd.f32 0.0, %v1133
    %v1135 = vpop.f32.mrb[0].mxu0
    %1136 = vmatprep.mubr.bf16.mxu0 0
    %1137 = vmatmul.mubr.bf16.gmra.mrb[0].mxu0 %v1089
    %v1138 = vpop.f32.mrb[0].mxu0
    %v1139 = vadd.f32 0.0, %v1138
    %v1140 = vpop.f32.mrb[0].mxu0
    %v1141 = vpop.f32.mrb[0].mxu0
    %v1142 = vadd.f32 0.0, %v1141
    %v1143 = vpop.f32.mrb[0].mxu0
    %1144 = vmatprep.mubr.bf16.mxu0 0
    %1145 = vmatmul.mubr.bf16.gmra.mrb[0].mxu0 %v1090
    %v1146 = vpop.f32.mrb[0].mxu0
    %v1147 = vadd.f32 0.0, %v1146
    %v1148 = vpop.f32.mrb[0].mxu0
    %v1149 = vpop.f32.mrb[0].mxu0
    %v1150 = vadd.f32 0.0, %v1149
    %v1151 = vpop.f32.mrb[0].mxu0
    %1152 = vmatprep.mubr.bf16.mxu0 0
    %1153 = vmatmul.mubr.bf16.gmra.mrb[0].mxu0 %v1091
    %v1154 = vpop.f32.mrb[0].mxu0
    %v1155 = vadd.f32 0.0, %v1154
    %v1156 = vpop.f32.mrb[0].mxu0
    %v1157 = vpop.f32.mrb[0].mxu0
    %v1158 = vadd.f32 0.0, %v1157
    %v1159 = vpop.f32.mrb[0].mxu0
    %1160 = vmatprep.mubr.bf16.mxu0 0
    %1161 = vmatmul.mubr.bf16.gmra.mrb[0].mxu0 %v1092
    %v1162 = vpop.f32.mrb[0].mxu0
    %v1163 = vadd.f32 0.0, %v1162
    %v1164 = vpop.f32.mrb[0].mxu0
    %v1165 = vpop.f32.mrb[0].mxu0
    %v1166 = vadd.f32 0.0, %v1165
    %v1167 = vpop.f32.mrb[0].mxu0
    %1168 = vmatprep.mubr.bf16.mxu0 0
    %1169 = vmatmul.mubr.bf16.gmra.mrb[0].mxu0 %v1093
    %v1170 = vpop.f32.mrb[0].mxu0
    %v1171 = vadd.f32 0.0, %v1170
    %v1172 = vpop.f32.mrb[0].mxu0
    %v1173 = vpop.f32.mrb[0].mxu0
    %v1174 = vadd.f32 0.0, %v1173
    %v1175 = vpop.f32.mrb[0].mxu0
    %1176 = vmatprep.mubr.bf16.mxu0 0
    %1177 = vmatmul.mubr.bf16.gmra.mrb[0].mxu0 %v1094
    %v1178 = vpop.f32.mrb[0].mxu0
    %v1179 = vadd.f32 0.0, %v1178
    %v1180 = vpop.f32.mrb[0].mxu0
    %v1181 = vpop.f32.mrb[0].mxu0
    %v1182 = vadd.f32 0.0, %v1181
    %v1183 = vpop.f32.mrb[0].mxu0
    %1184 = vmatprep.mubr.bf16.mxu0 0
    %1185 = vmatmul.mubr.bf16.gmra.mrb[0].mxu0 %v1095
    %v1186 = vpop.f32.mrb[0].mxu0
    %v1187 = vadd.f32 0.0, %v1186
    %v1188 = vpop.f32.mrb[0].mxu0
    %v1189 = vpop.f32.mrb[0].mxu0
    %v1190 = vadd.f32 0.0, %v1189
    %v1191 = vpop.f32.mrb[0].mxu0
    %1192 = vdwg.mxu0
    %1193 = vst [vmem:[#allocation2] sm:$0xff] %v1131
    %1194 = vst [vmem:[#allocation2 + $0x8] sm:$0xff] %v1134
    %1195 = vst [vmem:[#allocation2 + $0x10] sm:$0xff] %v1139
    %1196 = vst [vmem:[#allocation2 + $0x18] sm:$0xff] %v1142
    %1197 = vst [vmem:[#allocation2 + $0x20] sm:$0xff] %v1147
    %1198 = vst [vmem:[#allocation2 + $0x28] sm:$0xff] %v1150
    %1199 = vst [vmem:[#allocation2 + $0x30] sm:$0xff] %v1155
    %1200 = vst [vmem:[#allocation2 + $0x38] sm:$0xff] %v1158
    %1201 = vst [vmem:[#allocation2 + $0x40] sm:$0xff] %v1163
    %1202 = vst [vmem:[#allocation2 + $0x48] sm:$0xff] %v1166
    %1203 = vst [vmem:[#allocation2 + $0x50] sm:$0xff] %v1171
    %1204 = vst [vmem:[#allocation2 + $0x58] sm:$0xff] %v1174
    %1205 = vst [vmem:[#allocation2 + $0x60] sm:$0xff] %v1179
    %1206 = vst [vmem:[#allocation2 + $0x68] sm:$0xff] %v1182
    %1207 = vst [vmem:[#allocation2 + $0x70] sm:$0xff] %v1187
    %1208 = vst [vmem:[#allocation2 + $0x78] sm:$0xff] %v1190
    %v1209 = vld [vmem:[#allocation2] sm:$0xff]
    %v1210 = vld [vmem:[#allocation2 + $0x8] sm:$0xff]
    %v1211 = vld [vmem:[#allocation2 + $0x10] sm:$0xff]
    %v1212 = vld [vmem:[#allocation2 + $0x18] sm:$0xff]
    %v1213 = vld [vmem:[#allocation2 + $0x20] sm:$0xff]
    %v1214 = vld [vmem:[#allocation2 + $0x28] sm:$0xff]
    %v1215 = vld [vmem:[#allocation2 + $0x30] sm:$0xff]
    %v1216 = vld [vmem:[#allocation2 + $0x38] sm:$0xff]
    %v1217 = vld [vmem:[#allocation2 + $0x40] sm:$0xff]
    %v1218 = vld [vmem:[#allocation2 + $0x48] sm:$0xff]
    %v1219 = vld [vmem:[#allocation2 + $0x50] sm:$0xff]
    %v1220 = vld [vmem:[#allocation2 + $0x58] sm:$0xff]
    %v1221 = vld [vmem:[#allocation2 + $0x60] sm:$0xff]
    %v1222 = vld [vmem:[#allocation2 + $0x68] sm:$0xff]
    %v1223 = vld [vmem:[#allocation2 + $0x70] sm:$0xff]
    %v1224 = vld [vmem:[#allocation2 + $0x78] sm:$0xff]
    %1225 = vmatprep.subr.bf16.mxu0 0
    %1226 = vmatpush1.bf16.msra.mxu0 %v737
    %1227 = vmatprep.subr.bf16.mxu0 0
    %1228 = vmatpush1.bf16.msra.mxu0 %v738
    %1229 = vmatprep.subr.bf16.mxu0 0
    %1230 = vmatpush1.bf16.msra.mxu0 %v739
    %1231 = vmatprep.subr.bf16.mxu0 0
    %1232 = vmatpush1.bf16.msra.mxu0 %v740
    %1233 = vmatprep.subr.bf16.mxu0 0
    %1234 = vmatpush1.bf16.msra.mxu0 %v741
    %1235 = vmatprep.subr.bf16.mxu0 0
    %1236 = vmatpush1.bf16.msra.mxu0 %v742
    %1237 = vmatprep.subr.bf16.mxu0 0
    %1238 = vmatpush1.bf16.msra.mxu0 %v743
    %1239 = vmatprep.subr.bf16.mxu0 0
    %1240 = vmatpush1.bf16.msra.mxu0 %v744
    %1241 = vmatprep.subr.bf16.mxu0 0
    %1242 = vmatpush1.bf16.msra.mxu0 0
    %1243 = vmatprep.subr.bf16.mxu0 0
    %1244 = vmatpush1.bf16.msra.mxu0 0
    %1245 = vmatprep.subr.bf16.mxu0 0
    %1246 = vmatpush1.bf16.msra.mxu0 0
    %1247 = vmatprep.subr.bf16.mxu0 0
    %1248 = vmatpush1.bf16.msra.mxu0 0
    %1249 = vmatprep.subr.bf16.mxu0 0
    %1250 = vmatpush1.bf16.msra.mxu0 0
    %1251 = vmatprep.subr.bf16.mxu0 0
    %1252 = vmatpush1.bf16.msra.mxu0 0
    %1253 = vmatprep.subr.bf16.mxu0 0
    %1254 = vmatpush1.bf16.msra.mxu0 0
    %1255 = vmatprep.subr.bf16.mxu0 0
    %1256 = vmatpush1.bf16.msra.mxu0 0
    %1257 = vmatprep.mubr.bf16.mxu0 0
    %1258 = vmatmul.mubr.bf16.gmra.mrb[0].mxu0 %v1067
    %v1259 = vpop.f32.mrb[0].mxu0
    %v1260 = vadd.f32 0.0, %v1259
    %v1261 = vpop.f32.mrb[0].mxu0
    %v1262 = vpop.f32.mrb[0].mxu0
    %v1263 = vadd.f32 0.0, %v1262
    %v1264 = vpop.f32.mrb[0].mxu0
    %1265 = vmatprep.mubr.bf16.mxu0 0
    %1266 = vmatmul.mubr.bf16.gmra.mrb[0].mxu0 %v1068
    %v1267 = vpop.f32.mrb[0].mxu0
    %v1268 = vadd.f32 0.0, %v1267
    %v1269 = vpop.f32.mrb[0].mxu0
    %v1270 = vpop.f32.mrb[0].mxu0
    %v1271 = vadd.f32 0.0, %v1270
    %v1272 = vpop.f32.mrb[0].mxu0
    %1273 = vmatprep.mubr.bf16.mxu0 0
    %1274 = vmatmul.mubr.bf16.gmra.mrb[0].mxu0 %v1069
    %v1275 = vpop.f32.mrb[0].mxu0
    %v1276 = vadd.f32 0.0, %v1275
    %v1277 = vpop.f32.mrb[0].mxu0
    %v1278 = vpop.f32.mrb[0].mxu0
    %v1279 = vadd.f32 0.0, %v1278
    %v1280 = vpop.f32.mrb[0].mxu0
    %1281 = vmatprep.mubr.bf16.mxu0 0
    %1282 = vmatmul.mubr.bf16.gmra.mrb[0].mxu0 %v1070
    %v1283 = vpop.f32.mrb[0].mxu0
    %v1284 = vadd.f32 0.0, %v1283
    %v1285 = vpop.f32.mrb[0].mxu0
    %v1286 = vpop.f32.mrb[0].mxu0
    %v1287 = vadd.f32 0.0, %v1286
    %v1288 = vpop.f32.mrb[0].mxu0
    %1289 = vmatprep.mubr.bf16.mxu0 0
    %1290 = vmatmul.mubr.bf16.gmra.mrb[0].mxu0 %v1071
    %v1291 = vpop.f32.mrb[0].mxu0
    %v1292 = vadd.f32 0.0, %v1291
    %v1293 = vpop.f32.mrb[0].mxu0
    %v1294 = vpop.f32.mrb[0].mxu0
    %v1295 = vadd.f32 0.0, %v1294
    %v1296 = vpop.f32.mrb[0].mxu0
    %1297 = vmatprep.mubr.bf16.mxu0 0
    %1298 = vmatmul.mubr.bf16.gmra.mrb[0].mxu0 %v1072
    %v1299 = vpop.f32.mrb[0].mxu0
    %v1300 = vadd.f32 0.0, %v1299
    %v1301 = vpop.f32.mrb[0].mxu0
    %v1302 = vpop.f32.mrb[0].mxu0
    %v1303 = vadd.f32 0.0, %v1302
    %v1304 = vpop.f32.mrb[0].mxu0
    %1305 = vmatprep.mubr.bf16.mxu0 0
    %1306 = vmatmul.mubr.bf16.gmra.mrb[0].mxu0 %v1073
    %v1307 = vpop.f32.mrb[0].mxu0
    %v1308 = vadd.f32 0.0, %v1307
    %v1309 = vpop.f32.mrb[0].mxu0
    %v1310 = vpop.f32.mrb[0].mxu0
    %v1311 = vadd.f32 0.0, %v1310
    %v1312 = vpop.f32.mrb[0].mxu0
    %1313 = vmatprep.mubr.bf16.mxu0 0
    %1314 = vmatmul.mubr.bf16.gmra.mrb[0].mxu0 %v1074
    %v1315 = vpop.f32.mrb[0].mxu0
    %v1316 = vadd.f32 0.0, %v1315
    %v1317 = vpop.f32.mrb[0].mxu0
    %v1318 = vpop.f32.mrb[0].mxu0
    %v1319 = vadd.f32 0.0, %v1318
    %v1320 = vpop.f32.mrb[0].mxu0
    %1321 = vdwg.mxu0
    %v1322 = vsub.f32 %v1209, %v1260
    %v1323 = vsub.f32 %v1210, %v1263
    %v1324 = vsub.f32 %v1211, %v1268
    %v1325 = vsub.f32 %v1212, %v1271
    %v1326 = vsub.f32 %v1213, %v1276
    %v1327 = vsub.f32 %v1214, %v1279
    %v1328 = vsub.f32 %v1215, %v1284
    %v1329 = vsub.f32 %v1216, %v1287
    %v1330 = vsub.f32 %v1217, %v1292
    %v1331 = vsub.f32 %v1218, %v1295
    %v1332 = vsub.f32 %v1219, %v1300
    %v1333 = vsub.f32 %v1220, %v1303
    %v1334 = vsub.f32 %v1221, %v1308
    %v1335 = vsub.f32 %v1222, %v1311
    %v1336 = vsub.f32 %v1223, %v1316
    %v1337 = vsub.f32 %v1224, %v1319
    %v1338 = vadd.f32 %v1322, %v121
    %v1339 = vadd.f32 %v1323, %v121
    %v1340 = vadd.f32 %v1324, %v121
    %v1341 = vadd.f32 %v1325, %v121
    %v1342 = vadd.f32 %v1326, %v121
    %v1343 = vadd.f32 %v1327, %v121
    %v1344 = vadd.f32 %v1328, %v121
    %v1345 = vadd.f32 %v1329, %v121
    %v1346 = vadd.f32 %v1330, %v121
    %v1347 = vadd.f32 %v1331, %v121
    %v1348 = vadd.f32 %v1332, %v121
    %v1349 = vadd.f32 %v1333, %v121
    %v1350 = vadd.f32 %v1334, %v121
    %v1351 = vadd.f32 %v1335, %v121
    %v1352 = vadd.f32 %v1336, %v121
    %v1353 = vadd.f32 %v1337, %v121
    %v1354 = vmax.f32 %v1338, 0.0
    %v1355 = vmax.f32 %v1339, 0.0
    %v1356 = vmax.f32 %v1340, 0.0
    %v1357 = vmax.f32 %v1341, 0.0
    %v1358 = vmax.f32 %v1342, 0.0
    %v1359 = vmax.f32 %v1343, 0.0
    %v1360 = vmax.f32 %v1344, 0.0
    %v1361 = vmax.f32 %v1345, 0.0
    %v1362 = vmax.f32 %v1346, 0.0
    %v1363 = vmax.f32 %v1347, 0.0
    %v1364 = vmax.f32 %v1348, 0.0
    %v1365 = vmax.f32 %v1349, 0.0
    %v1366 = vmax.f32 %v1350, 0.0
    %v1367 = vmax.f32 %v1351, 0.0
    %v1368 = vmax.f32 %v1352, 0.0
    %v1369 = vmax.f32 %v1353, 0.0
    %v1370 = vmul.f32 %v930, 0.0
    %v1371 = vmul.f32 %v931, 0.0
    %v1372 = vmul.f32 %v932, 0.0
    %v1373 = vmul.f32 %v933, 0.0
    %v1374 = vmul.f32 %v934, 0.0
    %v1375 = vmul.f32 %v935, 0.0
    %v1376 = vmul.f32 %v936, 0.0
    %v1377 = vmul.f32 %v937, 0.0
    %v1378 = vmul.f32 %v938, 0.0
    %v1379 = vmul.f32 %v939, 0.0
    %v1380 = vmul.f32 %v940, 0.0
    %v1381 = vmul.f32 %v941, 0.0
    %v1382 = vmul.f32 %v942, 0.0
    %v1383 = vmul.f32 %v943, 0.0
    %v1384 = vmul.f32 %v944, 0.0
    %v1385 = vmul.f32 %v945, 0.0
    %v1386 = vadd.f32 %v1370, %v1354
    %v1387 = vadd.f32 %v1371, %v1355
    %v1388 = vadd.f32 %v1372, %v1356
    %v1389 = vadd.f32 %v1373, %v1357
    %v1390 = vadd.f32 %v1374, %v1358
    %v1391 = vadd.f32 %v1375, %v1359
    %v1392 = vadd.f32 %v1376, %v1360
    %v1393 = vadd.f32 %v1377, %v1361
    %v1394 = vadd.f32 %v1378, %v1362
    %v1395 = vadd.f32 %v1379, %v1363
    %v1396 = vadd.f32 %v1380, %v1364
    %v1397 = vadd.f32 %v1381, %v1365
    %v1398 = vadd.f32 %v1382, %v1366
    %v1399 = vadd.f32 %v1383, %v1367
    %v1400 = vadd.f32 %v1384, %v1368
    %v1401 = vadd.f32 %v1385, %v1369
    %v1402 = vsub.f32 %v1386, %v946
    %v1403 = vsub.f32 %v1387, %v947
    %v1404 = vsub.f32 %v1388, %v948
    %v1405 = vsub.f32 %v1389, %v949
    %v1406 = vsub.f32 %v1390, %v950
    %v1407 = vsub.f32 %v1391, %v951
    %v1408 = vsub.f32 %v1392, %v952
    %v1409 = vsub.f32 %v1393, %v953
    %v1410 = vsub.f32 %v1394, %v954
    %v1411 = vsub.f32 %v1395, %v955
    %v1412 = vsub.f32 %v1396, %v956
    %v1413 = vsub.f32 %v1397, %v957
    %v1414 = vsub.f32 %v1398, %v958
    %v1415 = vsub.f32 %v1399, %v959
    %v1416 = vsub.f32 %v1400, %v960
    %v1417 = vsub.f32 %v1401, %v961
    %v1418 = vadd.f32 %v946, %v1402
    %v1419 = vadd.f32 %v947, %v1403
    %v1420 = vadd.f32 %v948, %v1404
    %v1421 = vadd.f32 %v949, %v1405
    %v1422 = vadd.f32 %v950, %v1406
    %v1423 = vadd.f32 %v951, %v1407
    %v1424 = vadd.f32 %v952, %v1408
    %v1425 = vadd.f32 %v953, %v1409
    %v1426 = vadd.f32 %v954, %v1410
    %v1427 = vadd.f32 %v955, %v1411
    %v1428 = vadd.f32 %v956, %v1412
    %v1429 = vadd.f32 %v957, %v1413
    %v1430 = vadd.f32 %v958, %v1414
    %v1431 = vadd.f32 %v959, %v1415
    %v1432 = vadd.f32 %v960, %v1416
    %v1433 = vadd.f32 %v961, %v1417
    %v1434 = vpack.c.bf16 %v1419, %v1418
    %v1435 = vpack.c.bf16 %v1421, %v1420
    %v1436 = vpack.c.bf16 %v1423, %v1422
    %v1437 = vpack.c.bf16 %v1425, %v1424
    %v1438 = vpack.c.bf16 %v1427, %v1426
    %v1439 = vpack.c.bf16 %v1429, %v1428
    %v1440 = vpack.c.bf16 %v1431, %v1430
    %v1441 = vpack.c.bf16 %v1433, %v1432
    %1442 = vmatprep.subr.bf16.mxu0 0
    %1443 = vmatpush1.bf16.msra.mxu0 %v443
    %1444 = vmatprep.subr.bf16.mxu0 0
    %1445 = vmatpush1.bf16.msra.mxu0 %v444
    %1446 = vmatprep.subr.bf16.mxu0 0
    %1447 = vmatpush1.bf16.msra.mxu0 %v445
    %1448 = vmatprep.subr.bf16.mxu0 0
    %1449 = vmatpush1.bf16.msra.mxu0 %v446
    %1450 = vmatprep.subr.bf16.mxu0 0
    %1451 = vmatpush1.bf16.msra.mxu0 %v447
    %1452 = vmatprep.subr.bf16.mxu0 0
    %1453 = vmatpush1.bf16.msra.mxu0 %v448
    %1454 = vmatprep.subr.bf16.mxu0 0
    %1455 = vmatpush1.bf16.msra.mxu0 %v449
    %1456 = vmatprep.subr.bf16.mxu0 0
    %1457 = vmatpush1.bf16.msra.mxu0 %v450
    %1458 = vmatprep.subr.bf16.mxu0 0
    %1459 = vmatpush1.bf16.msra.mxu0 0
    %1460 = vmatprep.subr.bf16.mxu0 0
    %1461 = vmatpush1.bf16.msra.mxu0 0
    %1462 = vmatprep.subr.bf16.mxu0 0
    %1463 = vmatpush1.bf16.msra.mxu0 0
    %1464 = vmatprep.subr.bf16.mxu0 0
    %1465 = vmatpush1.bf16.msra.mxu0 0
    %1466 = vmatprep.subr.bf16.mxu0 0
    %1467 = vmatpush1.bf16.msra.mxu0 0
    %1468 = vmatprep.subr.bf16.mxu0 0
    %1469 = vmatpush1.bf16.msra.mxu0 0
    %1470 = vmatprep.subr.bf16.mxu0 0
    %1471 = vmatpush1.bf16.msra.mxu0 0
    %1472 = vmatprep.subr.bf16.mxu0 0
    %1473 = vmatpush1.bf16.msra.mxu0 0
    %1474 = vmatprep.mubr.bf16.mxu0 0
    %1475 = vmatmul.mubr.bf16.gmra.mrb[0].mxu0 %v1434
    %v1476 = vpop.f32.mrb[0].mxu0
    %v1477 = vadd.f32 0.0, %v1476
    %v1478 = vpop.f32.mrb[0].mxu0
    %v1479 = vpop.f32.mrb[0].mxu0
    %v1480 = vadd.f32 0.0, %v1479
    %v1481 = vpop.f32.mrb[0].mxu0
    %1482 = vmatprep.mubr.bf16.mxu0 0
    %1483 = vmatmul.mubr.bf16.gmra.mrb[0].mxu0 %v1435
    %v1484 = vpop.f32.mrb[0].mxu0
    %v1485 = vadd.f32 0.0, %v1484
    %v1486 = vpop.f32.mrb[0].mxu0
    %v1487 = vpop.f32.mrb[0].mxu0
    %v1488 = vadd.f32 0.0, %v1487
    %v1489 = vpop.f32.mrb[0].mxu0
    %1490 = vmatprep.mubr.bf16.mxu0 0
    %1491 = vmatmul.mubr.bf16.gmra.mrb[0].mxu0 %v1436
    %v1492 = vpop.f32.mrb[0].mxu0
    %v1493 = vadd.f32 0.0, %v1492
    %v1494 = vpop.f32.mrb[0].mxu0
    %v1495 = vpop.f32.mrb[0].mxu0
    %v1496 = vadd.f32 0.0, %v1495
    %v1497 = vpop.f32.mrb[0].mxu0
    %1498 = vmatprep.mubr.bf16.mxu0 0
    %1499 = vmatmul.mubr.bf16.gmra.mrb[0].mxu0 %v1437
    %v1500 = vpop.f32.mrb[0].mxu0
    %v1501 = vadd.f32 0.0, %v1500
    %v1502 = vpop.f32.mrb[0].mxu0
    %v1503 = vpop.f32.mrb[0].mxu0
    %v1504 = vadd.f32 0.0, %v1503
    %v1505 = vpop.f32.mrb[0].mxu0
    %1506 = vmatprep.mubr.bf16.mxu0 0
    %1507 = vmatmul.mubr.bf16.gmra.mrb[0].mxu0 %v1438
    %v1508 = vpop.f32.mrb[0].mxu0
    %v1509 = vadd.f32 0.0, %v1508
    %v1510 = vpop.f32.mrb[0].mxu0
    %v1511 = vpop.f32.mrb[0].mxu0
    %v1512 = vadd.f32 0.0, %v1511
    %v1513 = vpop.f32.mrb[0].mxu0
    %1514 = vmatprep.mubr.bf16.mxu0 0
    %1515 = vmatmul.mubr.bf16.gmra.mrb[0].mxu0 %v1439
    %v1516 = vpop.f32.mrb[0].mxu0
    %v1517 = vadd.f32 0.0, %v1516
    %v1518 = vpop.f32.mrb[0].mxu0
    %v1519 = vpop.f32.mrb[0].mxu0
    %v1520 = vadd.f32 0.0, %v1519
    %v1521 = vpop.f32.mrb[0].mxu0
    %1522 = vmatprep.mubr.bf16.mxu0 0
    %1523 = vmatmul.mubr.bf16.gmra.mrb[0].mxu0 %v1440
    %v1524 = vpop.f32.mrb[0].mxu0
    %v1525 = vadd.f32 0.0, %v1524
    %v1526 = vpop.f32.mrb[0].mxu0
    %v1527 = vpop.f32.mrb[0].mxu0
    %v1528 = vadd.f32 0.0, %v1527
    %v1529 = vpop.f32.mrb[0].mxu0
    %1530 = vmatprep.mubr.bf16.mxu0 0
    %1531 = vmatmul.mubr.bf16.gmra.mrb[0].mxu0 %v1441
    %v1532 = vpop.f32.mrb[0].mxu0
    %v1533 = vadd.f32 0.0, %v1532
    %v1534 = vpop.f32.mrb[0].mxu0
    %v1535 = vpop.f32.mrb[0].mxu0
    %v1536 = vadd.f32 0.0, %v1535
    %v1537 = vpop.f32.mrb[0].mxu0
    %1538 = vdwg.mxu0
    %v1539 = vpack.c.bf16 %v1480, %v1477
    %v1540 = vpack.c.bf16 %v1488, %v1485
    %v1541 = vpack.c.bf16 %v1496, %v1493
    %v1542 = vpack.c.bf16 %v1504, %v1501
    %v1543 = vpack.c.bf16 %v1512, %v1509
    %v1544 = vpack.c.bf16 %v1520, %v1517
    %v1545 = vpack.c.bf16 %v1528, %v1525
    %v1546 = vpack.c.bf16 %v1536, %v1533
    // Predicated region
    $region66: #{tpu_custom_call.1} parent=1 // pred_check
      _
    $region67: #{tpu_custom_call.1} parent=1 // pred_check_branch
      %1548 = sbr.rel target = $region69
    $region68: #{tpu_custom_call.1} parent=1 // pred_region
      %1549 = sst [smem:[#allocation17]] [#allocation22]
      %1550 = sst [smem:[#allocation18]] [#allocation21]
    $region69: #{tpu_custom_call.1} parent=1 // pred_fallthru
      _
    %1552 = shalt.err (0)
    %s1554 = sshll.u32 [#allocation3], 4
    %s1555 = int_to_ptr.vmem [resolvable:$true] %s1554
    %1557 = dma.hbm_to_vmem [thread:$0]  %s9, 1024, %s1555, [#allocation4]
    %s1558 = sshll.u32 %s565, 4
    %1559 = dma.done [#allocation4], %s1558
    %v1560 = vld [vmem:[#allocation3] sm:$0xff]
    %v1561 = vld [vmem:[#allocation3 + $0x8] sm:$0xff]
    %v1562 = vld [vmem:[#allocation3 + $0x10] sm:$0xff]
    %v1563 = vld [vmem:[#allocation3 + $0x18] sm:$0xff]
    %v1564 = vld [vmem:[#allocation3 + $0x20] sm:$0xff]
    %v1565 = vld [vmem:[#allocation3 + $0x28] sm:$0xff]
    %v1566 = vld [vmem:[#allocation3 + $0x30] sm:$0xff]
    %v1567 = vld [vmem:[#allocation3 + $0x38] sm:$0xff]
    %1568 = vmatprep.subr.bf16.mxu0 0
    %1569 = vmatpush1.bf16.msra.mxu0 %v1539
    %1570 = vmatprep.subr.bf16.mxu0 0
    %1571 = vmatpush1.bf16.msra.mxu0 %v1540
    %1572 = vmatprep.subr.bf16.mxu0 0
    %1573 = vmatpush1.bf16.msra.mxu0 %v1541
    %1574 = vmatprep.subr.bf16.mxu0 0
    %1575 = vmatpush1.bf16.msra.mxu0 %v1542
    %1576 = vmatprep.subr.bf16.mxu0 0
    %1577 = vmatpush1.bf16.msra.mxu0 %v1543
    %1578 = vmatprep.subr.bf16.mxu0 0
    %1579 = vmatpush1.bf16.msra.mxu0 %v1544
    %1580 = vmatprep.subr.bf16.mxu0 0
    %1581 = vmatpush1.bf16.msra.mxu0 %v1545
    %1582 = vmatprep.subr.bf16.mxu0 0
    %1583 = vmatpush1.bf16.msra.mxu0 %v1546
    %1584 = vmatprep.subr.bf16.mxu0 0
    %1585 = vmatpush1.bf16.msra.mxu0 0
    %1586 = vmatprep.subr.bf16.mxu0 0
    %1587 = vmatpush1.bf16.msra.mxu0 0
    %1588 = vmatprep.subr.bf16.mxu0 0
    %1589 = vmatpush1.bf16.msra.mxu0 0
    %1590 = vmatprep.subr.bf16.mxu0 0
    %1591 = vmatpush1.bf16.msra.mxu0 0
    %1592 = vmatprep.subr.bf16.mxu0 0
    %1593 = vmatpush1.bf16.msra.mxu0 0
    %1594 = vmatprep.subr.bf16.mxu0 0
    %1595 = vmatpush1.bf16.msra.mxu0 0
    %1596 = vmatprep.subr.bf16.mxu0 0
    %1597 = vmatpush1.bf16.msra.mxu0 0
    %1598 = vmatprep.subr.bf16.mxu0 0
    %1599 = vmatpush1.bf16.msra.mxu0 0
    %1600 = vmatprep.mubr.bf16.mxu0 0
    %1601 = vmatmul.mubr.bf16.gmra.mrb[0].mxu0 %v1560
    %v1602 = vpop.f32.mrb[0].mxu0
    %v1603 = vadd.f32 0.0, %v1602
    %v1604 = vpop.f32.mrb[0].mxu0
    %v1605 = vpop.f32.mrb[0].mxu0
    %v1606 = vadd.f32 0.0, %v1605
    %v1607 = vpop.f32.mrb[0].mxu0
    %1608 = vmatprep.mubr.bf16.mxu0 0
    %1609 = vmatmul.mubr.bf16.gmra.mrb[0].mxu0 %v1561
    %v1610 = vpop.f32.mrb[0].mxu0
    %v1611 = vadd.f32 0.0, %v1610
    %v1612 = vpop.f32.mrb[0].mxu0
    %v1613 = vpop.f32.mrb[0].mxu0
    %v1614 = vadd.f32 0.0, %v1613
    %v1615 = vpop.f32.mrb[0].mxu0
    %1616 = vmatprep.mubr.bf16.mxu0 0
    %1617 = vmatmul.mubr.bf16.gmra.mrb[0].mxu0 %v1562
    %v1618 = vpop.f32.mrb[0].mxu0
    %v1619 = vadd.f32 0.0, %v1618
    %v1620 = vpop.f32.mrb[0].mxu0
    %v1621 = vpop.f32.mrb[0].mxu0
    %v1622 = vadd.f32 0.0, %v1621
    %v1623 = vpop.f32.mrb[0].mxu0
    %1624 = vmatprep.mubr.bf16.mxu0 0
    %1625 = vmatmul.mubr.bf16.gmra.mrb[0].mxu0 %v1563
    %v1626 = vpop.f32.mrb[0].mxu0
    %v1627 = vadd.f32 0.0, %v1626
    %v1628 = vpop.f32.mrb[0].mxu0
    %v1629 = vpop.f32.mrb[0].mxu0
    %v1630 = vadd.f32 0.0, %v1629
    %v1631 = vpop.f32.mrb[0].mxu0
    %1632 = vmatprep.mubr.bf16.mxu0 0
    %1633 = vmatmul.mubr.bf16.gmra.mrb[0].mxu0 %v1564
    %v1634 = vpop.f32.mrb[0].mxu0
    %v1635 = vadd.f32 0.0, %v1634
    %v1636 = vpop.f32.mrb[0].mxu0
    %v1637 = vpop.f32.mrb[0].mxu0
    %v1638 = vadd.f32 0.0, %v1637
    %v1639 = vpop.f32.mrb[0].mxu0
    %1640 = vmatprep.mubr.bf16.mxu0 0
    %1641 = vmatmul.mubr.bf16.gmra.mrb[0].mxu0 %v1565
    %v1642 = vpop.f32.mrb[0].mxu0
    %v1643 = vadd.f32 0.0, %v1642
    %v1644 = vpop.f32.mrb[0].mxu0
    %v1645 = vpop.f32.mrb[0].mxu0
    %v1646 = vadd.f32 0.0, %v1645
    %v1647 = vpop.f32.mrb[0].mxu0
    %1648 = vmatprep.mubr.bf16.mxu0 0
    %1649 = vmatmul.mubr.bf16.gmra.mrb[0].mxu0 %v1566
    %v1650 = vpop.f32.mrb[0].mxu0
    %v1651 = vadd.f32 0.0, %v1650
    %v1652 = vpop.f32.mrb[0].mxu0
    %v1653 = vpop.f32.mrb[0].mxu0
    %v1654 = vadd.f32 0.0, %v1653
    %v1655 = vpop.f32.mrb[0].mxu0
    %1656 = vmatprep.mubr.bf16.mxu0 0
    %1657 = vmatmul.mubr.bf16.gmra.mrb[0].mxu0 %v1567
    %v1658 = vpop.f32.mrb[0].mxu0
    %v1659 = vadd.f32 0.0, %v1658
    %v1660 = vpop.f32.mrb[0].mxu0
    %v1661 = vpop.f32.mrb[0].mxu0
    %v1662 = vadd.f32 0.0, %v1661
    %v1663 = vpop.f32.mrb[0].mxu0
    %1664 = vdwg.mxu0
    %1665 = vst [vmem:[#allocation2] sm:$0xff] %v1603
    %1666 = vst [vmem:[#allocation2 + $0x8] sm:$0xff] %v1606
    %1667 = vst [vmem:[#allocation2 + $0x10] sm:$0xff] %v1611
    %1668 = vst [vmem:[#allocation2 + $0x18] sm:$0xff] %v1614
    %1669 = vst [vmem:[#allocation2 + $0x20] sm:$0xff] %v1619
    %1670 = vst [vmem:[#allocation2 + $0x28] sm:$0xff] %v1622
    %1671 = vst [vmem:[#allocation2 + $0x30] sm:$0xff] %v1627
    %1672 = vst [vmem:[#allocation2 + $0x38] sm:$0xff] %v1630
    %1673 = vst [vmem:[#allocation2 + $0x40] sm:$0xff] %v1635
    %1674 = vst [vmem:[#allocation2 + $0x48] sm:$0xff] %v1638
    %1675 = vst [vmem:[#allocation2 + $0x50] sm:$0xff] %v1643
    %1676 = vst [vmem:[#allocation2 + $0x58] sm:$0xff] %v1646
    %1677 = vst [vmem:[#allocation2 + $0x60] sm:$0xff] %v1651
    %1678 = vst [vmem:[#allocation2 + $0x68] sm:$0xff] %v1654
    %1679 = vst [vmem:[#allocation2 + $0x70] sm:$0xff] %v1659
    %1680 = vst [vmem:[#allocation2 + $0x78] sm:$0xff] %v1662
    %v1681 = vld [vmem:[#allocation2] sm:$0xff]
    %v1682 = vld [vmem:[#allocation2 + $0x8] sm:$0xff]
    %v1683 = vld [vmem:[#allocation2 + $0x10] sm:$0xff]
    %v1684 = vld [vmem:[#allocation2 + $0x18] sm:$0xff]
    %v1685 = vld [vmem:[#allocation2 + $0x20] sm:$0xff]
    %v1686 = vld [vmem:[#allocation2 + $0x28] sm:$0xff]
    %v1687 = vld [vmem:[#allocation2 + $0x30] sm:$0xff]
    %v1688 = vld [vmem:[#allocation2 + $0x38] sm:$0xff]
    %v1689 = vld [vmem:[#allocation2 + $0x40] sm:$0xff]
    %v1690 = vld [vmem:[#allocation2 + $0x48] sm:$0xff]
    %v1691 = vld [vmem:[#allocation2 + $0x50] sm:$0xff]
    %v1692 = vld [vmem:[#allocation2 + $0x58] sm:$0xff]
    %v1693 = vld [vmem:[#allocation2 + $0x60] sm:$0xff]
    %v1694 = vld [vmem:[#allocation2 + $0x68] sm:$0xff]
    %v1695 = vld [vmem:[#allocation2 + $0x70] sm:$0xff]
    %v1696 = vld [vmem:[#allocation2 + $0x78] sm:$0xff]
    %1697 = vmatprep.subr.bf16.mxu0 0
    %1698 = vmatpush1.bf16.msra.mxu0 %v737
    %1699 = vmatprep.subr.bf16.mxu0 0
    %1700 = vmatpush1.bf16.msra.mxu0 %v738
    %1701 = vmatprep.subr.bf16.mxu0 0
    %1702 = vmatpush1.bf16.msra.mxu0 %v739
    %1703 = vmatprep.subr.bf16.mxu0 0
    %1704 = vmatpush1.bf16.msra.mxu0 %v740
    %1705 = vmatprep.subr.bf16.mxu0 0
    %1706 = vmatpush1.bf16.msra.mxu0 %v741
    %1707 = vmatprep.subr.bf16.mxu0 0
    %1708 = vmatpush1.bf16.msra.mxu0 %v742
    %1709 = vmatprep.subr.bf16.mxu0 0
    %1710 = vmatpush1.bf16.msra.mxu0 %v743
    %1711 = vmatprep.subr.bf16.mxu0 0
    %1712 = vmatpush1.bf16.msra.mxu0 %v744
    %1713 = vmatprep.subr.bf16.mxu0 0
    %1714 = vmatpush1.bf16.msra.mxu0 0
    %1715 = vmatprep.subr.bf16.mxu0 0
    %1716 = vmatpush1.bf16.msra.mxu0 0
    %1717 = vmatprep.subr.bf16.mxu0 0
    %1718 = vmatpush1.bf16.msra.mxu0 0
    %1719 = vmatprep.subr.bf16.mxu0 0
    %1720 = vmatpush1.bf16.msra.mxu0 0
    %1721 = vmatprep.subr.bf16.mxu0 0
    %1722 = vmatpush1.bf16.msra.mxu0 0
    %1723 = vmatprep.subr.bf16.mxu0 0
    %1724 = vmatpush1.bf16.msra.mxu0 0
    %1725 = vmatprep.subr.bf16.mxu0 0
    %1726 = vmatpush1.bf16.msra.mxu0 0
    %1727 = vmatprep.subr.bf16.mxu0 0
    %1728 = vmatpush1.bf16.msra.mxu0 0
    %1729 = vmatprep.mubr.bf16.mxu0 0
    %1730 = vmatmul.mubr.bf16.gmra.mrb[0].mxu0 %v1539
    %v1731 = vpop.f32.mrb[0].mxu0
    %v1732 = vadd.f32 0.0, %v1731
    %v1733 = vpop.f32.mrb[0].mxu0
    %v1734 = vpop.f32.mrb[0].mxu0
    %v1735 = vadd.f32 0.0, %v1734
    %v1736 = vpop.f32.mrb[0].mxu0
    %1737 = vmatprep.mubr.bf16.mxu0 0
    %1738 = vmatmul.mubr.bf16.gmra.mrb[0].mxu0 %v1540
    %v1739 = vpop.f32.mrb[0].mxu0
    %v1740 = vadd.f32 0.0, %v1739
    %v1741 = vpop.f32.mrb[0].mxu0
    %v1742 = vpop.f32.mrb[0].mxu0
    %v1743 = vadd.f32 0.0, %v1742
    %v1744 = vpop.f32.mrb[0].mxu0
    %1745 = vmatprep.mubr.bf16.mxu0 0
    %1746 = vmatmul.mubr.bf16.gmra.mrb[0].mxu0 %v1541
    %v1747 = vpop.f32.mrb[0].mxu0
    %v1748 = vadd.f32 0.0, %v1747
    %v1749 = vpop.f32.mrb[0].mxu0
    %v1750 = vpop.f32.mrb[0].mxu0
    %v1751 = vadd.f32 0.0, %v1750
    %v1752 = vpop.f32.mrb[0].mxu0
    %1753 = vmatprep.mubr.bf16.mxu0 0
    %1754 = vmatmul.mubr.bf16.gmra.mrb[0].mxu0 %v1542
    %v1755 = vpop.f32.mrb[0].mxu0
    %v1756 = vadd.f32 0.0, %v1755
    %v1757 = vpop.f32.mrb[0].mxu0
    %v1758 = vpop.f32.mrb[0].mxu0
    %v1759 = vadd.f32 0.0, %v1758
    %v1760 = vpop.f32.mrb[0].mxu0
    %1761 = vmatprep.mubr.bf16.mxu0 0
    %1762 = vmatmul.mubr.bf16.gmra.mrb[0].mxu0 %v1543
    %v1763 = vpop.f32.mrb[0].mxu0
    %v1764 = vadd.f32 0.0, %v1763
    %v1765 = vpop.f32.mrb[0].mxu0
    %v1766 = vpop.f32.mrb[0].mxu0
    %v1767 = vadd.f32 0.0, %v1766
    %v1768 = vpop.f32.mrb[0].mxu0
    %1769 = vmatprep.mubr.bf16.mxu0 0
    %1770 = vmatmul.mubr.bf16.gmra.mrb[0].mxu0 %v1544
    %v1771 = vpop.f32.mrb[0].mxu0
    %v1772 = vadd.f32 0.0, %v1771
    %v1773 = vpop.f32.mrb[0].mxu0
    %v1774 = vpop.f32.mrb[0].mxu0
    %v1775 = vadd.f32 0.0, %v1774
    %v1776 = vpop.f32.mrb[0].mxu0
    %1777 = vmatprep.mubr.bf16.mxu0 0
    %1778 = vmatmul.mubr.bf16.gmra.mrb[0].mxu0 %v1545
    %v1779 = vpop.f32.mrb[0].mxu0
    %v1780 = vadd.f32 0.0, %v1779
    %v1781 = vpop.f32.mrb[0].mxu0
    %v1782 = vpop.f32.mrb[0].mxu0
    %v1783 = vadd.f32 0.0, %v1782
    %v1784 = vpop.f32.mrb[0].mxu0
    %1785 = vmatprep.mubr.bf16.mxu0 0
    %1786 = vmatmul.mubr.bf16.gmra.mrb[0].mxu0 %v1546
    %v1787 = vpop.f32.mrb[0].mxu0
    %v1788 = vadd.f32 0.0, %v1787
    %v1789 = vpop.f32.mrb[0].mxu0
    %v1790 = vpop.f32.mrb[0].mxu0
    %v1791 = vadd.f32 0.0, %v1790
    %v1792 = vpop.f32.mrb[0].mxu0
    %1793 = vdwg.mxu0
    %v1794 = vsub.f32 %v1681, %v1732
    %v1795 = vsub.f32 %v1682, %v1735
    %v1796 = vsub.f32 %v1683, %v1740
    %v1797 = vsub.f32 %v1684, %v1743
    %v1798 = vsub.f32 %v1685, %v1748
    %v1799 = vsub.f32 %v1686, %v1751
    %v1800 = vsub.f32 %v1687, %v1756
    %v1801 = vsub.f32 %v1688, %v1759
    %v1802 = vsub.f32 %v1689, %v1764
    %v1803 = vsub.f32 %v1690, %v1767
    %v1804 = vsub.f32 %v1691, %v1772
    %v1805 = vsub.f32 %v1692, %v1775
    %v1806 = vsub.f32 %v1693, %v1780
    %v1807 = vsub.f32 %v1694, %v1783
    %v1808 = vsub.f32 %v1695, %v1788
    %v1809 = vsub.f32 %v1696, %v1791
    %v1810 = vadd.f32 %v1794, %v121
    %v1811 = vadd.f32 %v1795, %v121
    %v1812 = vadd.f32 %v1796, %v121
    %v1813 = vadd.f32 %v1797, %v121
    %v1814 = vadd.f32 %v1798, %v121
    %v1815 = vadd.f32 %v1799, %v121
    %v1816 = vadd.f32 %v1800, %v121
    %v1817 = vadd.f32 %v1801, %v121
    %v1818 = vadd.f32 %v1802, %v121
    %v1819 = vadd.f32 %v1803, %v121
    %v1820 = vadd.f32 %v1804, %v121
    %v1821 = vadd.f32 %v1805, %v121
    %v1822 = vadd.f32 %v1806, %v121
    %v1823 = vadd.f32 %v1807, %v121
    %v1824 = vadd.f32 %v1808, %v121
    %v1825 = vadd.f32 %v1809, %v121
    %v1826 = vmax.f32 %v1810, 0.0
    %v1827 = vmax.f32 %v1811, 0.0
    %v1828 = vmax.f32 %v1812, 0.0
    %v1829 = vmax.f32 %v1813, 0.0
    %v1830 = vmax.f32 %v1814, 0.0
    %v1831 = vmax.f32 %v1815, 0.0
    %v1832 = vmax.f32 %v1816, 0.0
    %v1833 = vmax.f32 %v1817, 0.0
    %v1834 = vmax.f32 %v1818, 0.0
    %v1835 = vmax.f32 %v1819, 0.0
    %v1836 = vmax.f32 %v1820, 0.0
    %v1837 = vmax.f32 %v1821, 0.0
    %v1838 = vmax.f32 %v1822, 0.0
    %v1839 = vmax.f32 %v1823, 0.0
    %v1840 = vmax.f32 %v1824, 0.0
    %v1841 = vmax.f32 %v1825, 0.0
    %v1842 = vmul.f32 %v1402, 0.0
    %v1843 = vmul.f32 %v1403, 0.0
    %v1844 = vmul.f32 %v1404, 0.0
    %v1845 = vmul.f32 %v1405, 0.0
    %v1846 = vmul.f32 %v1406, 0.0
    %v1847 = vmul.f32 %v1407, 0.0
    %v1848 = vmul.f32 %v1408, 0.0
    %v1849 = vmul.f32 %v1409, 0.0
    %v1850 = vmul.f32 %v1410, 0.0
    %v1851 = vmul.f32 %v1411, 0.0
    %v1852 = vmul.f32 %v1412, 0.0
    %v1853 = vmul.f32 %v1413, 0.0
    %v1854 = vmul.f32 %v1414, 0.0
    %v1855 = vmul.f32 %v1415, 0.0
    %v1856 = vmul.f32 %v1416, 0.0
    %v1857 = vmul.f32 %v1417, 0.0
    %v1858 = vadd.f32 %v1842, %v1826
    %v1859 = vadd.f32 %v1843, %v1827
    %v1860 = vadd.f32 %v1844, %v1828
    %v1861 = vadd.f32 %v1845, %v1829
    %v1862 = vadd.f32 %v1846, %v1830
    %v1863 = vadd.f32 %v1847, %v1831
    %v1864 = vadd.f32 %v1848, %v1832
    %v1865 = vadd.f32 %v1849, %v1833
    %v1866 = vadd.f32 %v1850, %v1834
    %v1867 = vadd.f32 %v1851, %v1835
    %v1868 = vadd.f32 %v1852, %v1836
    %v1869 = vadd.f32 %v1853, %v1837
    %v1870 = vadd.f32 %v1854, %v1838
    %v1871 = vadd.f32 %v1855, %v1839
    %v1872 = vadd.f32 %v1856, %v1840
    %v1873 = vadd.f32 %v1857, %v1841
    %v1874 = vsub.f32 %v1858, %v1418
    %v1875 = vsub.f32 %v1859, %v1419
    %v1876 = vsub.f32 %v1860, %v1420
    %v1877 = vsub.f32 %v1861, %v1421
    %v1878 = vsub.f32 %v1862, %v1422
    %v1879 = vsub.f32 %v1863, %v1423
    %v1880 = vsub.f32 %v1864, %v1424
    %v1881 = vsub.f32 %v1865, %v1425
    %v1882 = vsub.f32 %v1866, %v1426
    %v1883 = vsub.f32 %v1867, %v1427
    %v1884 = vsub.f32 %v1868, %v1428
    %v1885 = vsub.f32 %v1869, %v1429
    %v1886 = vsub.f32 %v1870, %v1430
    %v1887 = vsub.f32 %v1871, %v1431
    %v1888 = vsub.f32 %v1872, %v1432
    %v1889 = vsub.f32 %v1873, %v1433
    %v1890 = vadd.f32 %v1418, %v1874
    %v1891 = vadd.f32 %v1419, %v1875
    %v1892 = vadd.f32 %v1420, %v1876
    %v1893 = vadd.f32 %v1421, %v1877
    %v1894 = vadd.f32 %v1422, %v1878
    %v1895 = vadd.f32 %v1423, %v1879
    %v1896 = vadd.f32 %v1424, %v1880
    %v1897 = vadd.f32 %v1425, %v1881
    %v1898 = vadd.f32 %v1426, %v1882
    %v1899 = vadd.f32 %v1427, %v1883
    %v1900 = vadd.f32 %v1428, %v1884
    %v1901 = vadd.f32 %v1429, %v1885
    %v1902 = vadd.f32 %v1430, %v1886
    %v1903 = vadd.f32 %v1431, %v1887
    %v1904 = vadd.f32 %v1432, %v1888
    %v1905 = vadd.f32 %v1433, %v1889
    %v1906 = vpack.c.bf16 %v1891, %v1890
    %v1907 = vpack.c.bf16 %v1893, %v1892
    %v1908 = vpack.c.bf16 %v1895, %v1894
    %v1909 = vpack.c.bf16 %v1897, %v1896
    %v1910 = vpack.c.bf16 %v1899, %v1898
    %v1911 = vpack.c.bf16 %v1901, %v1900
    %v1912 = vpack.c.bf16 %v1903, %v1902
    %v1913 = vpack.c.bf16 %v1905, %v1904
    %v1914 = vld [vmem:[#allocation13] sm:$0xf]
    %v1915 = vld [vmem:[#allocation13 + $0x4] sm:$0xf]
    %v1916 = vld [vmem:[#allocation13 + $0x8] sm:$0xf]
    %v1917 = vld [vmem:[#allocation13 + $0xc] sm:$0xf]
    %v1918 = vld [vmem:[#allocation13 + $0x10] sm:$0xf]
    %v1919 = vld [vmem:[#allocation13 + $0x14] sm:$0xf]
    %v1920 = vld [vmem:[#allocation13 + $0x18] sm:$0xf]
    %v1921 = vld [vmem:[#allocation13 + $0x1c] sm:$0xf]
    %v1922 = vld [vmem:[#allocation13 + $0x20] sm:$0xf]
    %v1923 = vld [vmem:[#allocation13 + $0x24] sm:$0xf]
    %v1924 = vld [vmem:[#allocation13 + $0x28] sm:$0xf]
    %v1925 = vld [vmem:[#allocation13 + $0x2c] sm:$0xf]
    %v1926 = vld [vmem:[#allocation13 + $0x30] sm:$0xf]
    %v1927 = vld [vmem:[#allocation13 + $0x34] sm:$0xf]
    %v1928 = vld [vmem:[#allocation13 + $0x38] sm:$0xf]
    %v1929 = vld [vmem:[#allocation13 + $0x3c] sm:$0xf]
    %v1930 = vld [vmem:[%s8] sm:$0x1]
    %v1932 = vlaneseq
    %v1933 = vshrl.u32 %v1932, 7
    %v1934 = vsub.s32 0, %v1933
    %v1935 = vrot.slane %v1930, %v1934
    %v1953 = vunpack.c.l.b16 %v1914
    %v1954 = vunpack.c.l.b16 %v1915
    %v1955 = vunpack.c.l.b16 %v1916
    %v1956 = vunpack.c.l.b16 %v1917
    %v1957 = vunpack.c.l.b16 %v1918
    %v1958 = vunpack.c.l.b16 %v1919
    %v1959 = vunpack.c.l.b16 %v1920
    %v1960 = vunpack.c.l.b16 %v1921
    %v1961 = vunpack.c.l.b16 %v1922
    %v1962 = vunpack.c.l.b16 %v1923
    %v1963 = vunpack.c.l.b16 %v1924
    %v1964 = vunpack.c.l.b16 %v1925
    %v1965 = vunpack.c.l.b16 %v1926
    %v1966 = vunpack.c.l.b16 %v1927
    %v1967 = vunpack.c.l.b16 %v1928
    %v1968 = vunpack.c.l.b16 %v1929
    %v1969 = vpack.c.b16 %v1954, %v1953
    %v1970 = vpack.c.b16 %v1956, %v1955
    %v1971 = vpack.c.b16 %v1958, %v1957
    %v1972 = vpack.c.b16 %v1960, %v1959
    %v1973 = vpack.c.b16 %v1962, %v1961
    %v1974 = vpack.c.b16 %v1964, %v1963
    %v1975 = vpack.c.b16 %v1966, %v1965
    %v1976 = vpack.c.b16 %v1968, %v1967
    %1985 = vmatprep.subr.bf16.mxu0 0
    %1986 = vmatpush1.bf16.msra.mxu0 %v1969
    %1987 = vmatprep.subr.bf16.mxu0 0
    %1988 = vmatpush1.bf16.msra.mxu0 %v1970
    %1989 = vmatprep.subr.bf16.mxu0 0
    %1990 = vmatpush1.bf16.msra.mxu0 %v1971
    %1991 = vmatprep.subr.bf16.mxu0 0
    %1992 = vmatpush1.bf16.msra.mxu0 %v1972
    %1993 = vmatprep.subr.bf16.mxu0 0
    %1994 = vmatpush1.bf16.msra.mxu0 %v1973
    %1995 = vmatprep.subr.bf16.mxu0 0
    %1996 = vmatpush1.bf16.msra.mxu0 %v1974
    %1997 = vmatprep.subr.bf16.mxu0 0
    %1998 = vmatpush1.bf16.msra.mxu0 %v1975
    %1999 = vmatprep.subr.bf16.mxu0 0
    %2000 = vmatpush1.bf16.msra.mxu0 %v1976
    %2001 = vmatprep.subr.bf16.mxu0 0
    %2002 = vmatpush1.bf16.msra.mxu0 0
    %2003 = vmatprep.subr.bf16.mxu0 0
    %2004 = vmatpush1.bf16.msra.mxu0 0
    %2005 = vmatprep.subr.bf16.mxu0 0
    %2006 = vmatpush1.bf16.msra.mxu0 0
    %2007 = vmatprep.subr.bf16.mxu0 0
    %2008 = vmatpush1.bf16.msra.mxu0 0
    %2009 = vmatprep.subr.bf16.mxu0 0
    %2010 = vmatpush1.bf16.msra.mxu0 0
    %2011 = vmatprep.subr.bf16.mxu0 0
    %2012 = vmatpush1.bf16.msra.mxu0 0
    %2013 = vmatprep.subr.bf16.mxu0 0
    %2014 = vmatpush1.bf16.msra.mxu0 0
    %2015 = vmatprep.subr.bf16.mxu0 0
    %2016 = vmatpush1.bf16.msra.mxu0 0
    %2017 = vmatprep.mubr.bf16.mxu0 0
    %2018 = vmatmul.mubr.bf16.gmra.mrb[0].mxu0 %v1906
    %v2019 = vpop.f32.mrb[0].mxu0
    %v2020 = vadd.f32 %v1935, %v2019
    %v2021 = vpop.f32.mrb[0].mxu0
    %v2022 = vpop.f32.mrb[0].mxu0
    %v2023 = vadd.f32 %v1935, %v2022
    %v2024 = vpop.f32.mrb[0].mxu0
    %2025 = vmatprep.mubr.bf16.mxu0 0
    %2026 = vmatmul.mubr.bf16.gmra.mrb[0].mxu0 %v1907
    %v2027 = vpop.f32.mrb[0].mxu0
    %v2028 = vadd.f32 %v1935, %v2027
    %v2029 = vpop.f32.mrb[0].mxu0
    %v2030 = vpop.f32.mrb[0].mxu0
    %v2031 = vadd.f32 %v1935, %v2030
    %v2032 = vpop.f32.mrb[0].mxu0
    %2033 = vmatprep.mubr.bf16.mxu0 0
    %2034 = vmatmul.mubr.bf16.gmra.mrb[0].mxu0 %v1908
    %v2035 = vpop.f32.mrb[0].mxu0
    %v2036 = vadd.f32 %v1935, %v2035
    %v2037 = vpop.f32.mrb[0].mxu0
    %v2038 = vpop.f32.mrb[0].mxu0
    %v2039 = vadd.f32 %v1935, %v2038
    %v2040 = vpop.f32.mrb[0].mxu0
    %2041 = vmatprep.mubr.bf16.mxu0 0
    %2042 = vmatmul.mubr.bf16.gmra.mrb[0].mxu0 %v1909
    %v2043 = vpop.f32.mrb[0].mxu0
    %v2044 = vadd.f32 %v1935, %v2043
    %v2045 = vpop.f32.mrb[0].mxu0
    %v2046 = vpop.f32.mrb[0].mxu0
    %v2047 = vadd.f32 %v1935, %v2046
    %v2048 = vpop.f32.mrb[0].mxu0
    %2049 = vmatprep.mubr.bf16.mxu0 0
    %2050 = vmatmul.mubr.bf16.gmra.mrb[0].mxu0 %v1910
    %v2051 = vpop.f32.mrb[0].mxu0
    %v2052 = vadd.f32 %v1935, %v2051
    %v2053 = vpop.f32.mrb[0].mxu0
    %v2054 = vpop.f32.mrb[0].mxu0
    %v2055 = vadd.f32 %v1935, %v2054
    %v2056 = vpop.f32.mrb[0].mxu0
    %2057 = vmatprep.mubr.bf16.mxu0 0
    %2058 = vmatmul.mubr.bf16.gmra.mrb[0].mxu0 %v1911
    %v2059 = vpop.f32.mrb[0].mxu0
    %v2060 = vadd.f32 %v1935, %v2059
    %v2061 = vpop.f32.mrb[0].mxu0
    %v2062 = vpop.f32.mrb[0].mxu0
    %v2063 = vadd.f32 %v1935, %v2062
    %v2064 = vpop.f32.mrb[0].mxu0
    %2065 = vmatprep.mubr.bf16.mxu0 0
    %2066 = vmatmul.mubr.bf16.gmra.mrb[0].mxu0 %v1912
    %v2067 = vpop.f32.mrb[0].mxu0
    %v2068 = vadd.f32 %v1935, %v2067
    %v2069 = vpop.f32.mrb[0].mxu0
    %v2070 = vpop.f32.mrb[0].mxu0
    %v2071 = vadd.f32 %v1935, %v2070
    %v2072 = vpop.f32.mrb[0].mxu0
    %2073 = vmatprep.mubr.bf16.mxu0 0
    %2074 = vmatmul.mubr.bf16.gmra.mrb[0].mxu0 %v1913
    %v2075 = vpop.f32.mrb[0].mxu0
    %v2076 = vadd.f32 %v1935, %v2075
    %v2077 = vpop.f32.mrb[0].mxu0
    %v2078 = vpop.f32.mrb[0].mxu0
    %v2079 = vadd.f32 %v1935, %v2078
    %v2080 = vpop.f32.mrb[0].mxu0
    %2081 = vdwg.mxu0
    %2082 = vst [vmem:[#allocation14] sm:$0xff] %v2020
    %2083 = vst [vmem:[#allocation14 + $0x8] sm:$0xff] %v2023
    %2084 = vst [vmem:[#allocation14 + $0x10] sm:$0xff] %v2028
    %2085 = vst [vmem:[#allocation14 + $0x18] sm:$0xff] %v2031
    %2086 = vst [vmem:[#allocation14 + $0x20] sm:$0xff] %v2036
    %2087 = vst [vmem:[#allocation14 + $0x28] sm:$0xff] %v2039
    %2088 = vst [vmem:[#allocation14 + $0x30] sm:$0xff] %v2044
    %2089 = vst [vmem:[#allocation14 + $0x38] sm:$0xff] %v2047
    %2090 = vst [vmem:[#allocation14 + $0x40] sm:$0xff] %v2052
    %2091 = vst [vmem:[#allocation14 + $0x48] sm:$0xff] %v2055
    %2092 = vst [vmem:[#allocation14 + $0x50] sm:$0xff] %v2060
    %2093 = vst [vmem:[#allocation14 + $0x58] sm:$0xff] %v2063
    %2094 = vst [vmem:[#allocation14 + $0x60] sm:$0xff] %v2068
    %2095 = vst [vmem:[#allocation14 + $0x68] sm:$0xff] %v2071
    %2096 = vst [vmem:[#allocation14 + $0x70] sm:$0xff] %v2076
    %2097 = vst [vmem:[#allocation14 + $0x78] sm:$0xff] %v2079
    // Predicated region
    $region70: #{tpu_custom_call.1} parent=1 // pred_check
      _
    $region71: #{tpu_custom_call.1} parent=1 // pred_check_branch
      %2099 = sbr.rel (0) target = $region73
    $region72: #{tpu_custom_call.1} parent=1 // pred_region
      %s2101 = ssub.s32 2048, 2048
      %2102 = vsyncadd [#allocation7], %s2101
      %s2103 = sshll.u32 [#allocation14], 4
      %s2104 = int_to_ptr.vmem [resolvable:$true] %s2103
      %2109 = dma.vmem_to_hbm [thread:$0]  %s2104, 2048, %s10, [#allocation7], 128, 128, 8
    $region73: #{tpu_custom_call.1} parent=1 // pred_fallthru
      _
    // Predicated region
    $region74: #{tpu_custom_call.1} parent=1 // pred_check
      _
    $region75: #{tpu_custom_call.1} parent=1 // pred_check_branch
      %2111 = sbr.rel (0) target = $region77
    $region76: #{tpu_custom_call.1} parent=1 // pred_region
      %2112 = dma.done [#allocation7], 2048
    $region77: #{tpu_custom_call.1} parent=1 // pred_fallthru
      _
    %2113 = vsyncpa [#allocation6], 1
    %2114 = vsyncpa [#allocation9], 1
    %2115 = vsyncpa [#allocation12], 1
    %2116 = vsyncpa [#allocation7], 1
  %2117 = vsyncmov [#allocation4]
  %s2118 = vpop.sfrf %2117
  %p2119 = scmp.eq.s32.totalorder %s2118, 0
  %p2120 = pneg %p2119
  %2122 = shalt.err (%p2120)
  %s2123 = scalar_lea.sflag [#allocation4], 1
  %2124 = vsyncmov %s2123
  %s2125 = vpop.sfrf %2124
  %p2126 = scmp.eq.s32.totalorder %s2125, 0
  %p2127 = pneg %p2126
  %2129 = shalt.err (%p2127)

</llo_original>
